<compile_context>
chip_gen: v7x
topology: tpu7x:2x2x1
jax: 0.10.0
libtpu: 0.0.40
codegen_flags: <defaults>
</compile_context>

<pallas_src>
import math

import jax
import jax.numpy as jnp
from jax.experimental import pallas as pl
from jax.experimental.pallas import tpu as pltpu

PAD = 1  # padding=1 is hard-coded in the PyTorch module


# ---------------- kernels ----------------

def _make_mean_kernel(inv_hw):
    def kernel(x_ref, sel_ref, m_ref):
        # x_ref: (bn, C*HW); sel_ref: (C*HW, C) 0/1 bf16; m_ref: (bn, C) f32.
        # bf16 operands on the MXU, f32 accumulate, divide by HW in f32 after.
        xb = x_ref[...].astype(jnp.bfloat16)
        s = jnp.dot(xb, sel_ref[...], preferred_element_type=jnp.float32)
        m_ref[...] = s * inv_hw
    return kernel


def _make_gate_kernel(Kt, Kc):
    def kernel(xa_ref, bdwt_ref, cs_ref, bdst_ref, wct_ref, g_ref):
        # xa_ref: (bg, C) spatial means, b-major rows for this batch tile.
        # bdwt_ref: (Kt, bg, bg) block-diag conv_t taps; cs_ref: (Kt, C, C) C-shift.
        # bdst_ref: (Kc, bg, bg) block-diag T-shift;     wct_ref: (Kc, C, C) conv_c taps^T.
        xa = xa_ref[...]
        ct = jnp.zeros_like(xa)
        for k in range(Kt):
            xs = jnp.dot(xa, cs_ref[k], preferred_element_type=jnp.float32)
            ct = ct + jnp.dot(bdwt_ref[k], xs, preferred_element_type=jnp.float32)
        cc = jnp.zeros_like(xa)
        for k in range(Kc):
            xs = jnp.dot(bdst_ref[k], xa, preferred_element_type=jnp.float32)
            cc = cc + jnp.dot(xs, wct_ref[k], preferred_element_type=jnp.float32)
        g_ref[...] = jax.nn.sigmoid(cc * ct)
    return kernel


def _scale_expand_kernel(x_ref, g_ref, e_ref, o_ref):
    # x_ref/o_ref: (bn, C*HW); g_ref: (bn, C); e_ref: (C, C*HW) 0/1 expander.
    g_full = jnp.dot(g_ref[...], e_ref[...], preferred_element_type=jnp.float32)
    o_ref[...] = (x_ref[...] * g_full).astype(o_ref.dtype)


def _scale_bcast_kernel(x_ref, g_ref, o_ref):
    # x_ref/o_ref: (bn, C, HW); g_ref: (bn, C, 1) — pure VPU lane broadcast.
    o_ref[...] = (x_ref[...] * g_ref[...]).astype(o_ref.dtype)


# ---------------- host-side constant folding (tiny, one-time) ----------------

def _shift_matrix(L, k):
    # S[r, c] = 1 iff c == r + (k - PAD)  (zero-padding conv tap shift)
    r = jnp.arange(L)[:, None]
    c = jnp.arange(L)[None, :]
    return (c == r + (k - PAD)).astype(jnp.float32)


def _channel_onehot(C, HW, dtype):
    # (C*HW, C) 0/1: column c selects the HW lanes of channel c.
    ch = jnp.arange(C * HW) // HW
    return (ch[:, None] == jnp.arange(C)[None, :]).astype(dtype)


def _gate_matrices(wt, wc, T, C, bb):
    """Per-tile gate constants: block-diagonal over bb batches and tiny shift
    selectors -> O(bb^2*T^2 + C^2) memory instead of O(N^2)."""
    Kt, Kc = wt.shape[-1], wc.shape[-1]
    eye_bb = jnp.eye(bb, dtype=jnp.float32)
    bdwt = jnp.stack([jnp.kron(eye_bb, wt[:, :, k].astype(jnp.float32))
                      for k in range(Kt)])                       # (Kt, bg, bg)
    cs = jnp.stack([_shift_matrix(C, k).T for k in range(Kt)])   # (Kt, C, C)
    bdst = jnp.stack([jnp.kron(eye_bb, _shift_matrix(T, k))
                      for k in range(Kc)])                       # (Kc, bg, bg)
    wct = jnp.stack([wc[:, :, k].astype(jnp.float32).T
                     for k in range(Kc)])                        # (Kc, C, C)
    return bdwt, cs, bdst, wct


# ---------------- tiling / VMEM budgeting ----------------

def _vmem_budget():
    cap = 64 * 1024 * 1024  # conservative fallback (v7x has 64 MiB per TC)
    try:
        info = pltpu.get_tpu_info()
        cap = int(getattr(info, "vmem_capacity_bytes", cap))
    except Exception:
        pass
    # <= ~48 MiB on v7x (64 MiB physical), ~64 MiB on v5e/v6e (128 MiB physical)
    return min((cap * 3) // 4, 64 * 1024 * 1024)


def _pick_bn(N, per_row_bytes, resident_bytes, budget, *, max_rows=1024, min_steps=2):
    """Largest row tile whose streamed (double-buffered) blocks + residents fit."""
    avail = max((budget - resident_bytes) * 7 // 8, per_row_bytes * 8)
    bn = int(avail // per_row_bytes)
    bn = min(bn, max_rows)
    if min_steps > 1 and N >= 8 * min_steps:
        bn = min(bn, -(-N // min_steps))   # >=2 grid steps: shard across v7x's 2 TCs
    bn = max(8, (bn // 8) * 8)
    bn = min(bn, max(8, ((N + 7) // 8) * 8))
    return bn


def _const_spec(shape, *, single=False):
    """Full-array block with a constant index map.  Large constants are
    single-buffered (pipeline_mode=pl.Buffered(1)) when the API supports it."""
    imap = lambda *_: (0,) * len(shape)
    if single:
        buffered = getattr(pl, "Buffered", None)
        if buffered is not None:
            try:
                return pl.BlockSpec(shape, imap, pipeline_mode=buffered(1))
            except TypeError:
                pass
    return pl.BlockSpec(shape, imap)


# ---------------- wrapper ----------------

def tcja_forward(x_seq, wt, wc, B, T, *, donate_x=False):
    """x_seq: (N=B*T, C, H, W) f32; wt: (T, T, Kt); wc: (C, C, Kc) (PyTorch Conv1d layout)."""
    N, C, H, W = x_seq.shape
    assert N == B * T
    Kt, Kc = wt.shape[-1], wc.shape[-1]
    # conv output lengths must equal their input lengths for the torch forward
    # to be broadcast-compatible (true for kernel_size=3, padding=1).
    assert C + 2 * PAD - Kt + 1 == C and T + 2 * PAD - Kc + 1 == T

    HW = H * W
    CHW = C * HW
    x2 = x_seq.reshape(N, CHW)              # lane-dense view; free, contiguous
    budget = _vmem_budget()

    def cparams(sem):
        return pltpu.CompilerParams(dimension_semantics=sem,
                                    vmem_limit_bytes=int(budget))

    # ---- pass 1: streamed spatial mean -> x_avg (N, C), parallel row grid ----
    sel = _channel_onehot(C, HW, jnp.bfloat16)          # (CHW, C) 0/1
    sel_bytes = sel.size * 2
    sel_single = sel_bytes > (1 << 20)
    per_row_m = CHW * 4 * 2 + CHW * 2 + C * 4 * 2       # x dbl-buf + bf16 temp + out dbl-buf
    res_m = sel_bytes * (1 if sel_single else 2)
    bn_m = _pick_bn(N, per_row_m, res_m, budget)
    x_avg = pl.pallas_call(
        _make_mean_kernel(1.0 / HW),
        out_shape=jax.ShapeDtypeStruct((N, C), jnp.float32),
        grid=(pl.cdiv(N, bn_m),),
        in_specs=[pl.BlockSpec((bn_m, CHW), lambda i: (i, 0)),
                  _const_spec(sel.shape, single=sel_single)],
        out_specs=pl.BlockSpec((bn_m, C), lambda i: (i, 0)),
        compiler_params=cparams(("parallel",)),
    )(x2, sel)

    # ---- pass 2: gate (tiny).  Batch-tiled block-diagonal convs. ----
    unit = 8 // math.gcd(T, 8)                          # smallest bb with bb*T % 8 == 0
    bb = max(unit, (256 // max(1, unit * T)) * unit)    # ~256 rows per gate tile
    bb = min(bb, -(-B // unit) * unit)
    Bp = -(-B // bb) * bb
    bg = bb * T
    xa_pad = jnp.pad(x_avg, ((0, Bp * T - N), (0, 0)))  # zero rows for padded batches
    bdwt, cs, bdst, wct = _gate_matrices(wt, wc, T, C, bb)
    gate_b = pl.pallas_call(
        _make_gate_kernel(Kt, Kc),
        out_shape=jax.ShapeDtypeStruct((Bp * T, C), jnp.float32),
        grid=(Bp // bb,),
        in_specs=[pl.BlockSpec((bg, C), lambda j: (j, 0)),
                  _const_spec(bdwt.shape),
                  _const_spec(cs.shape),
                  _const_spec(bdst.shape),
                  _const_spec(wct.shape)],
        out_specs=pl.BlockSpec((bg, C), lambda j: (j, 0)),
        compiler_params=cparams(("parallel",)),
    )(xa_pad, bdwt, cs, bdst, wct)
    # PyTorch reshapes the (T, B, C) gate t-major before scaling the b-major x
    # rows; apply that row permutation to the tiny (N, C) gate here (cheap XLA
    # op) rather than folding it into O(N^2) permutation matrices.
    gate = gate_b[:N].reshape(B, T, C).transpose(1, 0, 2).reshape(N, C)

    # ---- pass 3: y = x * gate (parallel, streamed) ----
    # TODO(synk): donate_x=True only when the caller can actually donate x_seq.
    io_alias = {0: 0} if donate_x else {}
    if HW % 128 == 0:
        # lane-friendly spatial dim: pure VPU broadcast, no C^2*HW expander matmul
        x3 = x_seq.reshape(N, C, HW)
        g3 = gate.reshape(N, C, 1)
        per_row_s = C * HW * 4 * 4 + C * 4 * 2
        bn_s = _pick_bn(N, per_row_s, 0, budget)
        y = pl.pallas_call(
            _scale_bcast_kernel,
            out_shape=jax.ShapeDtypeStruct((N, C, HW), x_seq.dtype),
            grid=(pl.cdiv(N, bn_s),),
            in_specs=[pl.BlockSpec((bn_s, C, HW), lambda i: (i, 0, 0)),
                      pl.BlockSpec((bn_s, C, 1), lambda i: (i, 0, 0))],
            out_specs=pl.BlockSpec((bn_s, C, HW), lambda i: (i, 0, 0)),
            compiler_params=cparams(("parallel",)),
            input_output_aliases=io_alias,
        )(x3, g3)
        return y.reshape(N, C, H, W)

    expand = _channel_onehot(C, HW, jnp.float32).T       # (C, CHW) 0/1
    exp_bytes = expand.size * 4
    exp_single = exp_bytes > (1 << 20)
    per_row_s = CHW * 4 * 2 * 2 + C * 4 * 2 + CHW * 4    # x/out dbl-buf + gate + g_full temp
    res_s = exp_bytes * (1 if exp_single else 2)
    bn_s = _pick_bn(N, per_row_s, res_s, budget)
    y2 = pl.pallas_call(
        _scale_expand_kernel,
        out_shape=jax.ShapeDtypeStruct((N, CHW), x_seq.dtype),
        grid=(pl.cdiv(N, bn_s),),
        in_specs=[pl.BlockSpec((bn_s, CHW), lambda i: (i, 0)),
                  pl.BlockSpec((bn_s, C), lambda i: (i, 0)),
                  _const_spec(expand.shape, single=exp_single)],
        out_specs=pl.BlockSpec((bn_s, CHW), lambda i: (i, 0)),
        compiler_params=cparams(("parallel",)),
        input_output_aliases=io_alias,
    )(x2, gate, expand)
    return y2.reshape(N, C, H, W)


# ---------------- pure-JAX reference (mirrors the torch forward) ----------------

def tcja_reference(x_seq, wt, wc, B, T):
    N, C, H, W = x_seq.shape
    Kt, Kc = wt.shape[-1], wc.shape[-1]
    x_avg = x_seq.mean(axis=(2, 3)).reshape(B, T, C)
    # conv_t : Conv1d(T->T, Kt, pad=1) applied to (B, T, C)
    xt_p = jnp.pad(x_avg, ((0, 0), (0, 0), (PAD, PAD)))
    Lt = C + 2 * PAD - Kt + 1
    ot = sum(jnp.einsum('oi,bil->bol', wt[:, :, k], xt_p[:, :, k:k + Lt])
             for k in range(Kt))
    # conv_c : Conv1d(C->C, Kc, pad=1) applied to (B, C, T)
    xc = jnp.transpose(x_avg, (0, 2, 1))
    xc_p = jnp.pad(xc, ((0, 0), (0, 0), (PAD, PAD)))
    Lc = T + 2 * PAD - Kc + 1
    oc = sum(jnp.einsum('oi,bil->bol', wc[:, :, k], xc_p[:, :, k:k + Lc])
             for k in range(Kc))
    ct = jnp.transpose(ot, (1, 0, 2))   # (T, B, C)
    cc = jnp.transpose(oc, (2, 0, 1))   # (T, B, C)
    gate = jax.nn.sigmoid(cc * ct).reshape(N, C)
    return x_seq * gate[:, :, None, None]


if __name__ == "__main__":
    # TODO(synk): defaults kernel_size_t=2 / kernel_size_c=1 make the reference
    # torch forward raise a broadcast-shape error; using kernel_size=3 here.
    B, T, C, H, W = 2, 8, 16, 8, 8
    Kt, Kc = 3, 3
    N = B * T

    key = jax.random.PRNGKey(0)
    kx, ktk, kck = jax.random.split(key, 3)
    x = jax.random.normal(kx, (N, C, H, W), jnp.float32)
    # Conv1d weights in PyTorch layout (out_channels, in_channels, kernel_size)
    wt = jax.random.normal(ktk, (T, T, Kt), jnp.float32) * (1.0 / (T * Kt) ** 0.5)
    wc = jax.random.normal(kck, (C, C, Kc), jnp.float32) * (1.0 / (C * Kc) ** 0.5)

    fwd = jax.jit(tcja_forward, static_argnums=(3, 4))
    y = jax.block_until_ready(fwd(x, wt, wc, B, T))

    y_ref = tcja_reference(x, wt, wc, B, T)
    assert y.shape == y_ref.shape == (N, C, H, W)
    err = float(jnp.max(jnp.abs(y - y_ref)))
    assert jnp.allclose(y, y_ref, atol=1e-3, rtol=1e-3), err
    print("KERNEL_OK")
</pallas_src>

<mosaic_0001>
module attributes {stable_mosaic.version = 11 : i64} {
  func.func @kernel(%arg0: i32, %arg1: memref<8x1024xf32, #tpu.memory_space<vmem>>, %arg2: memref<1024x16xbf16, #tpu.memory_space<vmem>>, %arg3: memref<8x16xf32, #tpu.memory_space<vmem>>) attributes {dimension_semantics = [#tpu.dimension_semantics<parallel>], iteration_bounds = array<i64: 2>, scalar_prefetch = 0 : i64, scratch_operands = 0 : i64, tpu.core_type = #tpu.core_type<tc>, window_params = [{transform_indices = @transform_0, window_bounds = array<i64: 8, 1024>}, {pipeline_mode = #tpu.pipeline_mode<synchronous>, transform_indices = @transform_1, window_bounds = array<i64: 1024, 16>}, {transform_indices = @transform_2, window_bounds = array<i64: 8, 16>}]} {
    %c0 = arith.constant 0 : index
    %c0_0 = arith.constant 0 : index
    %0 = vector.load %arg1[%c0, %c0_0] : memref<8x1024xf32, #tpu.memory_space<vmem>>, vector<8x1024xf32>
    %1 = arith.truncf %0 : vector<8x1024xf32> to vector<8x1024xbf16>
    %c0_1 = arith.constant 0 : index
    %c0_2 = arith.constant 0 : index
    %2 = vector.load %arg2[%c0_1, %c0_2] : memref<1024x16xbf16, #tpu.memory_space<vmem>>, vector<1024x16xbf16>
    %cst = arith.constant dense<0.000000e+00> : vector<8x16xf32>
    %3 = tpu.matmul %1, %2, %cst {dimension_numbers = #tpu.dot_dimension_numbers<[1], [0], [0], [1], [0, 0, 1, 1], [], []>} : vector<8x1024xbf16>, vector<1024x16xbf16>, vector<8x16xf32> -> vector<8x16xf32>
    %cst_3 = arith.constant 1.562500e-02 : f32
    %4 = vector.broadcast %cst_3 : f32 to vector<8x16xf32>
    %5 = arith.mulf %3, %4 : vector<8x16xf32>
    %c0_4 = arith.constant 0 : index
    %c0_5 = arith.constant 0 : index
    %6 = vector.load %arg3[%c0_4, %c0_5] : memref<8x16xf32, #tpu.memory_space<vmem>>, vector<8x16xf32>
    tpu.vector_store %arg3[%c0_4, %c0_5], %5 {strides = array<i32>} : memref<8x16xf32, #tpu.memory_space<vmem>>, vector<8x16xf32>,
    return
  }
  func.func @transform_0(%arg0: i32) -> (i32, i32) {
    %c0_i32 = arith.constant 0 : i32
    %c0_i32_0 = arith.constant 0 : i32
    return %arg0, %c0_i32 : i32, i32
  }
  func.func @transform_1(%arg0: i32) -> (i32, i32) {
    %c0_i32 = arith.constant 0 : i32
    %c0_i32_0 = arith.constant 0 : i32
    %c0_i32_1 = arith.constant 0 : i32
    return %c0_i32, %c0_i32_0 : i32, i32
  }
  func.func @transform_2(%arg0: i32) -> (i32, i32) {
    %c0_i32 = arith.constant 0 : i32
    %c0_i32_0 = arith.constant 0 : i32
    return %arg0, %c0_i32 : i32, i32
  }
}

module attributes {stable_mosaic.version = 11 : i64} {
  func.func @kernel(%arg0: i32, %arg1: memref<16x16xf32, #tpu.memory_space<vmem>>, %arg2: memref<3x16x16xf32, #tpu.memory_space<vmem>>, %arg3: memref<3x16x16xf32, #tpu.memory_space<vmem>>, %arg4: memref<3x16x16xf32, #tpu.memory_space<vmem>>, %arg5: memref<3x16x16xf32, #tpu.memory_space<vmem>>, %arg6: memref<16x16xf32, #tpu.memory_space<vmem>>) attributes {dimension_semantics = [#tpu.dimension_semantics<parallel>], iteration_bounds = array<i64: 1>, scalar_prefetch = 0 : i64, scratch_operands = 0 : i64, tpu.core_type = #tpu.core_type<tc>, window_params = [{transform_indices = @transform_0, window_bounds = array<i64: 16, 16>}, {pipeline_mode = #tpu.pipeline_mode<synchronous>, transform_indices = @transform_1, window_bounds = array<i64: 3, 16, 16>}, {pipeline_mode = #tpu.pipeline_mode<synchronous>, transform_indices = @transform_2, window_bounds = array<i64: 3, 16, 16>}, {pipeline_mode = #tpu.pipeline_mode<synchronous>, transform_indices = @transform_3, window_bounds = array<i64: 3, 16, 16>}, {pipeline_mode = #tpu.pipeline_mode<synchronous>, transform_indices = @transform_4, window_bounds = array<i64: 3, 16, 16>}, {transform_indices = @transform_5, window_bounds = array<i64: 16, 16>}]} {
    %c0 = arith.constant 0 : index
    %c0_0 = arith.constant 0 : index
    %0 = vector.load %arg1[%c0, %c0_0] : memref<16x16xf32, #tpu.memory_space<vmem>>, vector<16x16xf32>
    %cst = arith.constant 0.000000e+00 : f32
    %1 = vector.broadcast %cst : f32 to vector<16x16xf32>
    %c0_1 = arith.constant 0 : index
    %c0_2 = arith.constant 0 : index
    %c0_3 = arith.constant 0 : index
    %2 = vector.load %arg3[%c0_1, %c0_2, %c0_3] : memref<3x16x16xf32, #tpu.memory_space<vmem>>, vector<1x16x16xf32>
    %3 = vector.shape_cast %2 : vector<1x16x16xf32> to vector<16x16xf32>
    %cst_4 = arith.constant dense<0.000000e+00> : vector<16x16xf32>
    %4 = tpu.matmul %0, %3, %cst_4 {dimension_numbers = #tpu.dot_dimension_numbers<[1], [0], [0], [1], [0, 0, 1, 1], [], []>} : vector<16x16xf32>, vector<16x16xf32>, vector<16x16xf32> -> vector<16x16xf32>
    %c0_5 = arith.constant 0 : index
    %c0_6 = arith.constant 0 : index
    %c0_7 = arith.constant 0 : index
    %5 = vector.load %arg2[%c0_5, %c0_6, %c0_7] : memref<3x16x16xf32, #tpu.memory_space<vmem>>, vector<1x16x16xf32>
    %6 = vector.shape_cast %5 : vector<1x16x16xf32> to vector<16x16xf32>
    %cst_8 = arith.constant dense<0.000000e+00> : vector<16x16xf32>
    %7 = tpu.matmul %6, %4, %cst_8 {dimension_numbers = #tpu.dot_dimension_numbers<[1], [0], [0], [1], [0, 0, 1, 1], [], []>} : vector<16x16xf32>, vector<16x16xf32>, vector<16x16xf32> -> vector<16x16xf32>
    %8 = arith.addf %1, %7 : vector<16x16xf32>
    %c1 = arith.constant 1 : index
    %c0_9 = arith.constant 0 : index
    %c0_10 = arith.constant 0 : index
    %9 = vector.load %arg3[%c1, %c0_9, %c0_10] : memref<3x16x16xf32, #tpu.memory_space<vmem>>, vector<1x16x16xf32>
    %10 = vector.shape_cast %9 : vector<1x16x16xf32> to vector<16x16xf32>
    %cst_11 = arith.constant dense<0.000000e+00> : vector<16x16xf32>
    %11 = tpu.matmul %0, %10, %cst_11 {dimension_numbers = #tpu.dot_dimension_numbers<[1], [0], [0], [1], [0, 0, 1, 1], [], []>} : vector<16x16xf32>, vector<16x16xf32>, vector<16x16xf32> -> vector<16x16xf32>
    %c1_12 = arith.constant 1 : index
    %c0_13 = arith.constant 0 : index
    %c0_14 = arith.constant 0 : index
    %12 = vector.load %arg2[%c1_12, %c0_13, %c0_14] : memref<3x16x16xf32, #tpu.memory_space<vmem>>, vector<1x16x16xf32>
    %13 = vector.shape_cast %12 : vector<1x16x16xf32> to vector<16x16xf32>
    %cst_15 = arith.constant dense<0.000000e+00> : vector<16x16xf32>
    %14 = tpu.matmul %13, %11, %cst_15 {dimension_numbers = #tpu.dot_dimension_numbers<[1], [0], [0], [1], [0, 0, 1, 1], [], []>} : vector<16x16xf32>, vector<16x16xf32>, vector<16x16xf32> -> vector<16x16xf32>
    %15 = arith.addf %8, %14 : vector<16x16xf32>
    %c2 = arith.constant 2 : index
    %c0_16 = arith.constant 0 : index
    %c0_17 = arith.constant 0 : index
    %16 = vector.load %arg3[%c2, %c0_16, %c0_17] : memref<3x16x16xf32, #tpu.memory_space<vmem>>, vector<1x16x16xf32>
    %17 = vector.shape_cast %16 : vector<1x16x16xf32> to vector<16x16xf32>
    %cst_18 = arith.constant dense<0.000000e+00> : vector<16x16xf32>
    %18 = tpu.matmul %0, %17, %cst_18 {dimension_numbers = #tpu.dot_dimension_numbers<[1], [0], [0], [1], [0, 0, 1, 1], [], []>} : vector<16x16xf32>, vector<16x16xf32>, vector<16x16xf32> -> vector<16x16xf32>
    %c2_19 = arith.constant 2 : index
    %c0_20 = arith.constant 0 : index
    %c0_21 = arith.constant 0 : index
    %19 = vector.load %arg2[%c2_19, %c0_20, %c0_21] : memref<3x16x16xf32, #tpu.memory_space<vmem>>, vector<1x16x16xf32>
    %20 = vector.shape_cast %19 : vector<1x16x16xf32> to vector<16x16xf32>
    %cst_22 = arith.constant dense<0.000000e+00> : vector<16x16xf32>
    %21 = tpu.matmul %20, %18, %cst_22 {dimension_numbers = #tpu.dot_dimension_numbers<[1], [0], [0], [1], [0, 0, 1, 1], [], []>} : vector<16x16xf32>, vector<16x16xf32>, vector<16x16xf32> -> vector<16x16xf32>
    %22 = arith.addf %15, %21 : vector<16x16xf32>
    %cst_23 = arith.constant 0.000000e+00 : f32
    %23 = vector.broadcast %cst_23 : f32 to vector<16x16xf32>
    %c0_24 = arith.constant 0 : index
    %c0_25 = arith.constant 0 : index
    %c0_26 = arith.constant 0 : index
    %24 = vector.load %arg4[%c0_24, %c0_25, %c0_26] : memref<3x16x16xf32, #tpu.memory_space<vmem>>, vector<1x16x16xf32>
    %25 = vector.shape_cast %24 : vector<1x16x16xf32> to vector<16x16xf32>
    %cst_27 = arith.constant dense<0.000000e+00> : vector<16x16xf32>
    %26 = tpu.matmul %25, %0, %cst_27 {dimension_numbers = #tpu.dot_dimension_numbers<[1], [0], [0], [1], [0, 0, 1, 1], [], []>} : vector<16x16xf32>, vector<16x16xf32>, vector<16x16xf32> -> vector<16x16xf32>
    %c0_28 = arith.constant 0 : index
    %c0_29 = arith.constant 0 : index
    %c0_30 = arith.constant 0 : index
    %27 = vector.load %arg5[%c0_28, %c0_29, %c0_30] : memref<3x16x16xf32, #tpu.memory_space<vmem>>, vector<1x16x16xf32>
    %28 = vector.shape_cast %27 : vector<1x16x16xf32> to vector<16x16xf32>
    %cst_31 = arith.constant dense<0.000000e+00> : vector<16x16xf32>
    %29 = tpu.matmul %26, %28, %cst_31 {dimension_numbers = #tpu.dot_dimension_numbers<[1], [0], [0], [1], [0, 0, 1, 1], [], []>} : vector<16x16xf32>, vector<16x16xf32>, vector<16x16xf32> -> vector<16x16xf32>
    %30 = arith.addf %23, %29 : vector<16x16xf32>
    %c1_32 = arith.constant 1 : index
    %c0_33 = arith.constant 0 : index
    %c0_34 = arith.constant 0 : index
    %31 = vector.load %arg4[%c1_32, %c0_33, %c0_34] : memref<3x16x16xf32, #tpu.memory_space<vmem>>, vector<1x16x16xf32>
    %32 = vector.shape_cast %31 : vector<1x16x16xf32> to vector<16x16xf32>
    %cst_35 = arith.constant dense<0.000000e+00> : vector<16x16xf32>
    %33 = tpu.matmul %32, %0, %cst_35 {dimension_numbers = #tpu.dot_dimension_numbers<[1], [0], [0], [1], [0, 0, 1, 1], [], []>} : vector<16x16xf32>, vector<16x16xf32>, vector<16x16xf32> -> vector<16x16xf32>
    %c1_36 = arith.constant 1 : index
    %c0_37 = arith.constant 0 : index
    %c0_38 = arith.constant 0 : index
    %34 = vector.load %arg5[%c1_36, %c0_37, %c0_38] : memref<3x16x16xf32, #tpu.memory_space<vmem>>, vector<1x16x16xf32>
    %35 = vector.shape_cast %34 : vector<1x16x16xf32> to vector<16x16xf32>
    %cst_39 = arith.constant dense<0.000000e+00> : vector<16x16xf32>
    %36 = tpu.matmul %33, %35, %cst_39 {dimension_numbers = #tpu.dot_dimension_numbers<[1], [0], [0], [1], [0, 0, 1, 1], [], []>} : vector<16x16xf32>, vector<16x16xf32>, vector<16x16xf32> -> vector<16x16xf32>
    %37 = arith.addf %30, %36 : vector<16x16xf32>
    %c2_40 = arith.constant 2 : index
    %c0_41 = arith.constant 0 : index
    %c0_42 = arith.constant 0 : index
    %38 = vector.load %arg4[%c2_40, %c0_41, %c0_42] : memref<3x16x16xf32, #tpu.memory_space<vmem>>, vector<1x16x16xf32>
    %39 = vector.shape_cast %38 : vector<1x16x16xf32> to vector<16x16xf32>
    %cst_43 = arith.constant dense<0.000000e+00> : vector<16x16xf32>
    %40 = tpu.matmul %39, %0, %cst_43 {dimension_numbers = #tpu.dot_dimension_numbers<[1], [0], [0], [1], [0, 0, 1, 1], [], []>} : vector<16x16xf32>, vector<16x16xf32>, vector<16x16xf32> -> vector<16x16xf32>
    %c2_44 = arith.constant 2 : index
    %c0_45 = arith.constant 0 : index
    %c0_46 = arith.constant 0 : index
    %41 = vector.load %arg5[%c2_44, %c0_45, %c0_46] : memref<3x16x16xf32, #tpu.memory_space<vmem>>, vector<1x16x16xf32>
    %42 = vector.shape_cast %41 : vector<1x16x16xf32> to vector<16x16xf32>
    %cst_47 = arith.constant dense<0.000000e+00> : vector<16x16xf32>
    %43 = tpu.matmul %40, %42, %cst_47 {dimension_numbers = #tpu.dot_dimension_numbers<[1], [0], [0], [1], [0, 0, 1, 1], [], []>} : vector<16x16xf32>, vector<16x16xf32>, vector<16x16xf32> -> vector<16x16xf32>
    %44 = arith.addf %37, %43 : vector<16x16xf32>
    %45 = arith.mulf %44, %22 : vector<16x16xf32>
    %46 = arith.negf %45 : vector<16x16xf32>
    %47 = math.exp %46 : vector<16x16xf32>
    %cst_48 = arith.constant 1.000000e+00 : f32
    %48 = vector.broadcast %cst_48 : f32 to vector<16x16xf32>
    %49 = arith.addf %48, %47 : vector<16x16xf32>
    %50 = arith.divf %48, %49 : vector<16x16xf32>
    %c0_49 = arith.constant 0 : index
    %c0_50 = arith.constant 0 : index
    %51 = vector.load %arg6[%c0_49, %c0_50] : memref<16x16xf32, #tpu.memory_space<vmem>>, vector<16x16xf32>
    tpu.vector_store %arg6[%c0_49, %c0_50], %50 {strides = array<i32>} : memref<16x16xf32, #tpu.memory_space<vmem>>, vector<16x16xf32>,
    return
  }
  func.func @transform_0(%arg0: i32) -> (i32, i32) {
    %c0_i32 = arith.constant 0 : i32
    %c0_i32_0 = arith.constant 0 : i32
    return %arg0, %c0_i32 : i32, i32
  }
  func.func @transform_1(%arg0: i32) -> (i32, i32, i32) {
    %c0_i32 = arith.constant 0 : i32
    %c0_i32_0 = arith.constant 0 : i32
    %c0_i32_1 = arith.constant 0 : i32
    %c0_i32_2 = arith.constant 0 : i32
    return %c0_i32, %c0_i32_0, %c0_i32_1 : i32, i32, i32
  }
  func.func @transform_2(%arg0: i32) -> (i32, i32, i32) {
    %c0_i32 = arith.constant 0 : i32
    %c0_i32_0 = arith.constant 0 : i32
    %c0_i32_1 = arith.constant 0 : i32
    %c0_i32_2 = arith.constant 0 : i32
    return %c0_i32, %c0_i32_0, %c0_i32_1 : i32, i32, i32
  }
  func.func @transform_3(%arg0: i32) -> (i32, i32, i32) {
    %c0_i32 = arith.constant 0 : i32
    %c0_i32_0 = arith.constant 0 : i32
    %c0_i32_1 = arith.constant 0 : i32
    %c0_i32_2 = arith.constant 0 : i32
    return %c0_i32, %c0_i32_0, %c0_i32_1 : i32, i32, i32
  }
  func.func @transform_4(%arg0: i32) -> (i32, i32, i32) {
    %c0_i32 = arith.constant 0 : i32
    %c0_i32_0 = arith.constant 0 : i32
    %c0_i32_1 = arith.constant 0 : i32
    %c0_i32_2 = arith.constant 0 : i32
    return %c0_i32, %c0_i32_0, %c0_i32_1 : i32, i32, i32
  }
  func.func @transform_5(%arg0: i32) -> (i32, i32) {
    %c0_i32 = arith.constant 0 : i32
    %c0_i32_0 = arith.constant 0 : i32
    return %arg0, %c0_i32 : i32, i32
  }
}

module attributes {stable_mosaic.version = 11 : i64} {
  func.func @_scale_expand_kernel(%arg0: i32, %arg1: memref<8x1024xf32, #tpu.memory_space<vmem>>, %arg2: memref<8x16xf32, #tpu.memory_space<vmem>>, %arg3: memref<16x1024xf32, #tpu.memory_space<vmem>>, %arg4: memref<8x1024xf32, #tpu.memory_space<vmem>>) attributes {dimension_semantics = [#tpu.dimension_semantics<parallel>], iteration_bounds = array<i64: 2>, scalar_prefetch = 0 : i64, scratch_operands = 0 : i64, tpu.core_type = #tpu.core_type<tc>, window_params = [{transform_indices = @transform_0, window_bounds = array<i64: 8, 1024>}, {transform_indices = @transform_1, window_bounds = array<i64: 8, 16>}, {pipeline_mode = #tpu.pipeline_mode<synchronous>, transform_indices = @transform_2, window_bounds = array<i64: 16, 1024>}, {transform_indices = @transform_3, window_bounds = array<i64: 8, 1024>}]} {
    %c0 = arith.constant 0 : index
    %c0_0 = arith.constant 0 : index
    %0 = vector.load %arg2[%c0, %c0_0] : memref<8x16xf32, #tpu.memory_space<vmem>>, vector<8x16xf32>
    %c0_1 = arith.constant 0 : index
    %c0_2 = arith.constant 0 : index
    %1 = vector.load %arg3[%c0_1, %c0_2] : memref<16x1024xf32, #tpu.memory_space<vmem>>, vector<16x1024xf32>
    %cst = arith.constant dense<0.000000e+00> : vector<8x1024xf32>
    %2 = tpu.matmul %0, %1, %cst {dimension_numbers = #tpu.dot_dimension_numbers<[1], [0], [0], [1], [0, 0, 1, 1], [], []>} : vector<8x16xf32>, vector<16x1024xf32>, vector<8x1024xf32> -> vector<8x1024xf32>
    %c0_3 = arith.constant 0 : index
    %c0_4 = arith.constant 0 : index
    %3 = vector.load %arg1[%c0_3, %c0_4] : memref<8x1024xf32, #tpu.memory_space<vmem>>, vector<8x1024xf32>
    %4 = arith.mulf %3, %2 : vector<8x1024xf32>
    %c0_5 = arith.constant 0 : index
    %c0_6 = arith.constant 0 : index
    %5 = vector.load %arg4[%c0_5, %c0_6] : memref<8x1024xf32, #tpu.memory_space<vmem>>, vector<8x1024xf32>
    tpu.vector_store %arg4[%c0_5, %c0_6], %4 {strides = array<i32>} : memref<8x1024xf32, #tpu.memory_space<vmem>>, vector<8x1024xf32>,
    return
  }
  func.func @transform_0(%arg0: i32) -> (i32, i32) {
    %c0_i32 = arith.constant 0 : i32
    %c0_i32_0 = arith.constant 0 : i32
    return %arg0, %c0_i32 : i32, i32
  }
  func.func @transform_1(%arg0: i32) -> (i32, i32) {
    %c0_i32 = arith.constant 0 : i32
    %c0_i32_0 = arith.constant 0 : i32
    return %arg0, %c0_i32 : i32, i32
  }
  func.func @transform_2(%arg0: i32) -> (i32, i32) {
    %c0_i32 = arith.constant 0 : i32
    %c0_i32_0 = arith.constant 0 : i32
    %c0_i32_1 = arith.constant 0 : i32
    return %c0_i32, %c0_i32_0 : i32, i32
  }
  func.func @transform_3(%arg0: i32) -> (i32, i32) {
    %c0_i32 = arith.constant 0 : i32
    %c0_i32_0 = arith.constant 0 : i32
    return %arg0, %c0_i32 : i32, i32
  }
}

</mosaic_0001>

<llo_original>
// kernel: tcja_forward.5
$region0: #{tcja_forward.5}
  #allocation0 [shape = 'u32[]', space=smem, size = 0x4, offset = 0x4, fixed_abs, tag = 'smem constant byte address 0x4 - core index']
  #allocation1 [shape = 'u32[144,128]{1,0:T(1,128)}', space=vmem, size = 0x12000, scoped, tag = 'internal scratch']
  %s0 = inlined_call_operand.vmem [shape: f32[16,1024], index: 0, kind: input, shape index: {}]
  %s1 = inlined_call_operand.vmem [shape: f32[16,16], index: 1, kind: input, shape index: {}]
  %s2 = inlined_call_operand.vmem [shape: f32[16,1024], index: 2, kind: input, shape index: {}]
  %s3 = inlined_call_operand.vmem [shape: f32[16,1024], index: 3, kind: output, shape index: {}]
  %s4 = sld [smem:[#allocation0]]
  $region45: #{tcja_forward.5} parent=0
    _
  %s6 = ssub.s32 1, %s4
  %s7 = scalar_select 0, %s6, %s4
  loop: start=0, step=1, limit=4
  $region2: #{tcja_forward.5} parent=0 // loop_pre_header
    _
  $region3: #{tcja_forward.5} parent=0 // loop_header
    %s9 = sphi 0, %s13
    %p10 = scmp.ge.s32.totalorder %s9, 4
    %s19 = sphi 0, %s21
    %s22 = sphi 0, %s19
    %s23 = sphi 0, %s22
    %s39 = sphi 0, %s23
    %s45 = sphi 0, %s47
    %s48 = sphi 0, %s45
    %s49 = sphi 0, %s48
    %s65 = sphi 0, %s49
    %s69 = sphi 0, %s69
    %s71 = sphi 0, %s69
    %s72 = sphi 0, %s71
    %s86 = sphi 0, %s72
    %s92 = sphi 0, %s94
    %s95 = sphi 0, %s92
    %s96 = sphi 0, %s95
    %s112 = sphi 0, %s96
  $region4: #{tcja_forward.5} parent=0 // loop_header_branch
    %12 = sbr.rel (%p10) target = $region8
  $region5: #{tcja_forward.5} parent=0 // loop_body
    %s14 = ssub.s32 %s9, 1
    %s15 = ssub.s32 %s9, 2
    %s16 = sadd.s32 %s9, 1
    %s17 = ssub.s32 %s9, %s16
    %p18 = scmp.eq.s32.totalorder %s17, 0
    %s20 = sadd.s32 %s19, 1
    %s21 = scalar_select %p18, %s19, %s20
    %p24 = pneg %p18
    %p25 = scmp.eq.s32.totalorder %s9, 1
    %p26 = por %p24, %p25
    %p27 = scmp.ne.s32.totalorder %s19, %s22
    %p28 = scmp.eq.s32.totalorder %s9, 0
    %p29 = por %p27, %p28
    %p30 = scmp.ne.s32.totalorder %s19, %s22
    %p31 = scmp.eq.s32.totalorder %s14, 1
    %p32 = por %p30, %p31
    %p33 = scmp.ne.s32.totalorder %s22, %s23
    %p34 = scmp.eq.s32.totalorder %s14, 0
    %p35 = por %p33, %p34
    %p36 = scmp.ne.s32.totalorder %s22, %s23
    %p37 = scmp.eq.s32.totalorder %s15, 1
    %p38 = por %p36, %p37
    %p40 = scmp.ne.s32.totalorder %s23, %s39
    %p41 = scmp.eq.s32.totalorder %s15, 0
    %p42 = por %p40, %p41
    %s43 = ssub.s32 %s9, %s16
    %p44 = scmp.eq.s32.totalorder %s43, 0
    %s46 = sadd.s32 %s45, 1
    %s47 = scalar_select %p44, %s45, %s46
    %p50 = pneg %p44
    %p51 = scmp.eq.s32.totalorder %s9, 1
    %p52 = por %p50, %p51
    %p53 = scmp.ne.s32.totalorder %s45, %s48
    %p54 = scmp.eq.s32.totalorder %s9, 0
    %p55 = por %p53, %p54
    %p56 = scmp.ne.s32.totalorder %s45, %s48
    %p57 = scmp.eq.s32.totalorder %s14, 1
    %p58 = por %p56, %p57
    %p59 = scmp.ne.s32.totalorder %s48, %s49
    %p60 = scmp.eq.s32.totalorder %s14, 0
    %p61 = por %p59, %p60
    %p62 = scmp.ne.s32.totalorder %s48, %s49
    %p63 = scmp.eq.s32.totalorder %s15, 1
    %p64 = por %p62, %p63
    %p66 = scmp.ne.s32.totalorder %s49, %s65
    %p67 = scmp.eq.s32.totalorder %s15, 0
    %p68 = por %p66, %p67
    %s70 = sadd.s32 %s69, 1
    %p73 = scmp.eq.s32.totalorder %s9, 1
    %p74 = scmp.ne.s32.totalorder %s69, %s71
    %p75 = scmp.eq.s32.totalorder %s9, 0
    %p76 = por %p74, %p75
    %p77 = scmp.ne.s32.totalorder %s69, %s71
    %p78 = scmp.eq.s32.totalorder %s14, 1
    %p79 = por %p77, %p78
    %p80 = scmp.ne.s32.totalorder %s71, %s72
    %p81 = scmp.eq.s32.totalorder %s14, 0
    %p82 = por %p80, %p81
    %p83 = scmp.ne.s32.totalorder %s71, %s72
    %p84 = scmp.eq.s32.totalorder %s15, 1
    %p85 = por %p83, %p84
    %p87 = scmp.ne.s32.totalorder %s72, %s86
    %p88 = scmp.eq.s32.totalorder %s15, 0
    %p89 = por %p87, %p88
    %s90 = ssub.s32 %s9, %s16
    %p91 = scmp.eq.s32.totalorder %s90, 0
    %s93 = sadd.s32 %s92, 1
    %s94 = scalar_select %p91, %s92, %s93
    %p97 = pneg %p91
    %p98 = scmp.eq.s32.totalorder %s9, 1
    %p99 = por %p97, %p98
    %p100 = scmp.ne.s32.totalorder %s92, %s95
    %p101 = scmp.eq.s32.totalorder %s9, 0
    %p102 = por %p100, %p101
    %p103 = scmp.ne.s32.totalorder %s92, %s95
    %p104 = scmp.eq.s32.totalorder %s14, 1
    %p105 = por %p103, %p104
    %p106 = scmp.ne.s32.totalorder %s95, %s96
    %p107 = scmp.eq.s32.totalorder %s14, 0
    %p108 = por %p106, %p107
    %p109 = scmp.ne.s32.totalorder %s95, %s96
    %p110 = scmp.eq.s32.totalorder %s15, 1
    %p111 = por %p109, %p110
    %p113 = scmp.ne.s32.totalorder %s96, %s112
    %p114 = scmp.eq.s32.totalorder %s15, 0
    %p115 = por %p113, %p114
    %p116 = scmp.le.s32.totalorder 1, %s9
    %p117 = scmp.lt.s32.totalorder %s9, 3
    %p118 = pnand %p116, %p117
    %p119 = pneg %p118
    // Predicated region
    $region9: #{tcja_forward.5} parent=5 // pred_check
      _
    $region10: #{tcja_forward.5} parent=5 // pred_check_branch
      %121 = sbr.rel (%p118) target = $region12
    $region11: #{tcja_forward.5} parent=5 // pred_region
      %s122 = ssub.s32 %s9, 1
      // Predicated region
      $region13: #{tcja_forward.5} parent=11 // pred_check
        %p123 = pneg %p82
      $region14: #{tcja_forward.5} parent=11 // pred_check_branch
        %125 = sbr.rel (%p123) target = $region16
      $region15: #{tcja_forward.5} parent=11 // pred_region
        _
      $region16: #{tcja_forward.5} parent=11 // pred_fallthru
        _
    $region12: #{tcja_forward.5} parent=5 // pred_fallthru
      _
    %p126 = scmp.lt.s32.totalorder %s9, 2
    // Predicated region
    $region17: #{tcja_forward.5} parent=5 // pred_check
      %p127 = pneg %p126
    $region18: #{tcja_forward.5} parent=5 // pred_check_branch
      %129 = sbr.rel (%p127) target = $region20
    $region19: #{tcja_forward.5} parent=5 // pred_region
      // Predicated region
      $region21: #{tcja_forward.5} parent=19 // pred_check
        %p130 = pneg %p29
      $region22: #{tcja_forward.5} parent=19 // pred_check_branch
        %132 = sbr.rel (%p130) target = $region24
      $region23: #{tcja_forward.5} parent=19 // pred_region
        %p133 = scmp.lt.s32.totalorder %s9, 1
        %s134 = scalar_select %p133, %s9, 1
        %s135 = smul.addr %s134, 8
        %s136 = smul.addr %s135, 8
        %s137 = scalar_lea.vmem %s0, %s136
      $region24: #{tcja_forward.5} parent=19 // pred_fallthru
        _
      // Predicated region
      $region25: #{tcja_forward.5} parent=19 // pred_check
        %p138 = pneg %p55
      $region26: #{tcja_forward.5} parent=19 // pred_check_branch
        %140 = sbr.rel (%p138) target = $region28
      $region27: #{tcja_forward.5} parent=19 // pred_region
        %p141 = scmp.lt.s32.totalorder %s9, 1
        %s142 = scalar_select %p141, %s9, 1
        %s143 = smul.addr %s142, 8
        %s144 = scalar_lea.vmem %s1, %s143
      $region28: #{tcja_forward.5} parent=19 // pred_fallthru
        _
    $region20: #{tcja_forward.5} parent=5 // pred_fallthru
      _
    %p145 = scmp.le.s32.totalorder 1, %s9
    %p146 = scmp.lt.s32.totalorder %s9, 3
    %p147 = pnand %p145, %p146
    %p148 = pneg %p147
    // Predicated region
    $region29: #{tcja_forward.5} parent=5 // pred_check
      _
    $region30: #{tcja_forward.5} parent=5 // pred_check_branch
      %150 = sbr.rel (%p147) target = $region32
    $region31: #{tcja_forward.5} parent=5 // pred_region
      %s151 = ssub.s32 %s9, 1
      %p152 = scmp.lt.s32.totalorder %s14, 1
      %s153 = scalar_select %p152, %s14, 1
      %s154 = smul.addr %s153, 8
      %s155 = smul.addr %s154, 8
      %s156 = scalar_lea.vmem %s0, %s155
      %p157 = pneg %p35
      %p158 = pneg %p32
      %p159 = scmp.lt.s32.totalorder %s14, 1
      %s160 = scalar_select %p159, %s14, 1
      %s161 = smul.addr %s160, 8
      %s162 = scalar_lea.vmem %s1, %s161
      %p163 = pneg %p61
      %p164 = pneg %p58
      %p165 = pneg %p82
      %p166 = pneg %p79
      %p167 = pneg %p108
      %p168 = pneg %p105
      %p169 = scmp.lt.s32.totalorder %s14, 1
      %s170 = scalar_select %p169, %s14, 1
      %s171 = smul.addr %s170, 8
      %s172 = smul.addr %s171, 8
      %s173 = scalar_lea.vmem %s3, %s172
      %p174 = scmp.lt.s32.totalorder %s14, 1
      %s175 = scalar_select %p174, %s14, 1
      %s176 = smul.addr %s175, 8
      %s177 = smul.addr %s176, 8
      %s178 = scalar_lea.vmem %s0, %s177
      %p179 = scmp.lt.s32.totalorder %s14, 1
      %s180 = scalar_select %p179, %s14, 1
      %s181 = smul.addr %s180, 8
      %s182 = scalar_lea.vmem %s1, %s181
      %p183 = scmp.lt.s32.totalorder %s14, 1
      %s184 = scalar_select %p183, %s14, 1
      %s185 = smul.addr %s184, 8
      %s186 = smul.addr %s185, 8
      %s187 = scalar_lea.vmem %s3, %s186
      %v188 = vld [vmem:[%s182] sm:$0xff]
      %v189 = vld [vmem:[%s2] sm:$0xff]
      %v190 = vld [vmem:[%s2 + $0x8] sm:$0xff]
      %v191 = vld [vmem:[%s2 + $0x10] sm:$0xff]
      %v192 = vld [vmem:[%s2 + $0x18] sm:$0xff]
      %v193 = vld [vmem:[%s2 + $0x20] sm:$0xff]
      %v194 = vld [vmem:[%s2 + $0x28] sm:$0xff]
      %v195 = vld [vmem:[%s2 + $0x30] sm:$0xff]
      %v196 = vld [vmem:[%s2 + $0x38] sm:$0xff]
      %v197 = vld [vmem:[%s2 + $0x40] sm:$0xff]
      %v198 = vld [vmem:[%s2 + $0x48] sm:$0xff]
      %v199 = vld [vmem:[%s2 + $0x50] sm:$0xff]
      %v200 = vld [vmem:[%s2 + $0x58] sm:$0xff]
      %v201 = vld [vmem:[%s2 + $0x60] sm:$0xff]
      %v202 = vld [vmem:[%s2 + $0x68] sm:$0xff]
      %v203 = vld [vmem:[%s2 + $0x70] sm:$0xff]
      %v204 = vld [vmem:[%s2 + $0x78] sm:$0xff]
      %vm205 = vcmask 130048
      %v207 = vsel %vm205, %v188, 0
      %209 = vmatprep.subr.mxu0 %v190
      %210 = vmatpush1.msra.mxu0 %v189
      %211 = vmatprep.subr.mxu0 %v198
      %212 = vmatpush1.msra.mxu0 %v197
      %213 = vmatprep.subr.mxu0 0.0
      %214 = vmatpush1.msra.mxu0 0.0
      %215 = vmatprep.subr.mxu0 0.0
      %216 = vmatpush1.msra.mxu0 0.0
      %217 = vmatprep.subr.mxu0 0.0
      %218 = vmatpush1.msra.mxu0 0.0
      %219 = vmatprep.subr.mxu0 0.0
      %220 = vmatpush1.msra.mxu0 0.0
      %221 = vmatprep.subr.mxu0 0.0
      %222 = vmatpush1.msra.mxu0 0.0
      %223 = vmatprep.subr.mxu0 0.0
      %224 = vmatpush1.msra.mxu0 0.0
      %225 = vmatprep.subr.mxu0 0.0
      %226 = vmatpush1.msra.mxu0 0.0
      %227 = vmatprep.subr.mxu0 0.0
      %228 = vmatpush1.msra.mxu0 0.0
      %229 = vmatprep.subr.mxu0 0.0
      %230 = vmatpush1.msra.mxu0 0.0
      %231 = vmatprep.subr.mxu0 0.0
      %232 = vmatpush1.msra.mxu0 0.0
      %233 = vmatprep.subr.mxu0 0.0
      %234 = vmatpush1.msra.mxu0 0.0
      %235 = vmatprep.subr.mxu0 0.0
      %236 = vmatpush1.msra.mxu0 0.0
      %237 = vmatprep.subr.mxu0 0.0
      %238 = vmatpush1.msra.mxu0 0.0
      %239 = vmatprep.subr.mxu0 0.0
      %240 = vmatpush1.msra.mxu0 0.0
      %241 = vmatprep.subr.mxu0 0.0
      %242 = vmatpush1.msra.mxu0 0.0
      %243 = vmatprep.subr.mxu0 0.0
      %244 = vmatpush1.msra.mxu0 0.0
      %245 = vmatprep.subr.mxu0 0.0
      %246 = vmatpush1.msra.mxu0 0.0
      %247 = vmatprep.subr.mxu0 0.0
      %248 = vmatpush1.msra.mxu0 0.0
      %249 = vmatprep.subr.mxu0 0.0
      %250 = vmatpush1.msra.mxu0 0.0
      %251 = vmatprep.subr.mxu0 0.0
      %252 = vmatpush1.msra.mxu0 0.0
      %253 = vmatprep.subr.mxu0 0.0
      %254 = vmatpush1.msra.mxu0 0.0
      %255 = vmatprep.subr.mxu0 0.0
      %256 = vmatpush1.msra.mxu0 0.0
      %257 = vmatprep.subr.mxu0 0.0
      %258 = vmatpush1.msra.mxu0 0.0
      %259 = vmatprep.subr.mxu0 0.0
      %260 = vmatpush1.msra.mxu0 0.0
      %261 = vmatprep.subr.mxu0 0.0
      %262 = vmatpush1.msra.mxu0 0.0
      %263 = vmatprep.subr.mxu0 0.0
      %264 = vmatpush1.msra.mxu0 0.0
      %265 = vmatprep.subr.mxu0 0.0
      %266 = vmatpush1.msra.mxu0 0.0
      %267 = vmatprep.subr.mxu0 0.0
      %268 = vmatpush1.msra.mxu0 0.0
      %269 = vmatprep.subr.mxu0 0.0
      %270 = vmatpush1.msra.mxu0 0.0
      %271 = vmatprep.subr.mxu0 0.0
      %272 = vmatpush1.msra.mxu0 0.0
      %273 = vmatprep.mubr.f32.mxu0 0.0
      %274 = vmatmul.mubr.f32.gmra.mrb[0].mxu0 %v207
      %v275 = vpop.f32.mrb[0].mxu0
      %v276 = vadd.f32 0.0, %v275
      %v277 = vpop.f32.mrb[0].mxu0
      %v278 = vadd.f32 0.0, %v277
      %279 = vdwg.mxu0
      %280 = vmatprep.subr.mxu0 %v192
      %281 = vmatpush1.msra.mxu0 %v191
      %282 = vmatprep.subr.mxu0 %v200
      %283 = vmatpush1.msra.mxu0 %v199
      %284 = vmatprep.subr.mxu0 0.0
      %285 = vmatpush1.msra.mxu0 0.0
      %286 = vmatprep.subr.mxu0 0.0
      %287 = vmatpush1.msra.mxu0 0.0
      %288 = vmatprep.subr.mxu0 0.0
      %289 = vmatpush1.msra.mxu0 0.0
      %290 = vmatprep.subr.mxu0 0.0
      %291 = vmatpush1.msra.mxu0 0.0
      %292 = vmatprep.subr.mxu0 0.0
      %293 = vmatpush1.msra.mxu0 0.0
      %294 = vmatprep.subr.mxu0 0.0
      %295 = vmatpush1.msra.mxu0 0.0
      %296 = vmatprep.subr.mxu0 0.0
      %297 = vmatpush1.msra.mxu0 0.0
      %298 = vmatprep.subr.mxu0 0.0
      %299 = vmatpush1.msra.mxu0 0.0
      %300 = vmatprep.subr.mxu0 0.0
      %301 = vmatpush1.msra.mxu0 0.0
      %302 = vmatprep.subr.mxu0 0.0
      %303 = vmatpush1.msra.mxu0 0.0
      %304 = vmatprep.subr.mxu0 0.0
      %305 = vmatpush1.msra.mxu0 0.0
      %306 = vmatprep.subr.mxu0 0.0
      %307 = vmatpush1.msra.mxu0 0.0
      %308 = vmatprep.subr.mxu0 0.0
      %309 = vmatpush1.msra.mxu0 0.0
      %310 = vmatprep.subr.mxu0 0.0
      %311 = vmatpush1.msra.mxu0 0.0
      %312 = vmatprep.subr.mxu0 0.0
      %313 = vmatpush1.msra.mxu0 0.0
      %314 = vmatprep.subr.mxu0 0.0
      %315 = vmatpush1.msra.mxu0 0.0
      %316 = vmatprep.subr.mxu0 0.0
      %317 = vmatpush1.msra.mxu0 0.0
      %318 = vmatprep.subr.mxu0 0.0
      %319 = vmatpush1.msra.mxu0 0.0
      %320 = vmatprep.subr.mxu0 0.0
      %321 = vmatpush1.msra.mxu0 0.0
      %322 = vmatprep.subr.mxu0 0.0
      %323 = vmatpush1.msra.mxu0 0.0
      %324 = vmatprep.subr.mxu0 0.0
      %325 = vmatpush1.msra.mxu0 0.0
      %326 = vmatprep.subr.mxu0 0.0
      %327 = vmatpush1.msra.mxu0 0.0
      %328 = vmatprep.subr.mxu0 0.0
      %329 = vmatpush1.msra.mxu0 0.0
      %330 = vmatprep.subr.mxu0 0.0
      %331 = vmatpush1.msra.mxu0 0.0
      %332 = vmatprep.subr.mxu0 0.0
      %333 = vmatpush1.msra.mxu0 0.0
      %334 = vmatprep.subr.mxu0 0.0
      %335 = vmatpush1.msra.mxu0 0.0
      %336 = vmatprep.subr.mxu0 0.0
      %337 = vmatpush1.msra.mxu0 0.0
      %338 = vmatprep.subr.mxu0 0.0
      %339 = vmatpush1.msra.mxu0 0.0
      %340 = vmatprep.subr.mxu0 0.0
      %341 = vmatpush1.msra.mxu0 0.0
      %342 = vmatprep.subr.mxu0 0.0
      %343 = vmatpush1.msra.mxu0 0.0
      %344 = vmatprep.mubr.f32.mxu0 0.0
      %345 = vmatmul.mubr.f32.gmra.mrb[0].mxu0 %v207
      %v346 = vpop.f32.mrb[0].mxu0
      %v347 = vadd.f32 0.0, %v346
      %v348 = vpop.f32.mrb[0].mxu0
      %v349 = vadd.f32 0.0, %v348
      %350 = vdwg.mxu0
      %351 = vmatprep.subr.mxu0 %v194
      %352 = vmatpush1.msra.mxu0 %v193
      %353 = vmatprep.subr.mxu0 %v202
      %354 = vmatpush1.msra.mxu0 %v201
      %355 = vmatprep.subr.mxu0 0.0
      %356 = vmatpush1.msra.mxu0 0.0
      %357 = vmatprep.subr.mxu0 0.0
      %358 = vmatpush1.msra.mxu0 0.0
      %359 = vmatprep.subr.mxu0 0.0
      %360 = vmatpush1.msra.mxu0 0.0
      %361 = vmatprep.subr.mxu0 0.0
      %362 = vmatpush1.msra.mxu0 0.0
      %363 = vmatprep.subr.mxu0 0.0
      %364 = vmatpush1.msra.mxu0 0.0
      %365 = vmatprep.subr.mxu0 0.0
      %366 = vmatpush1.msra.mxu0 0.0
      %367 = vmatprep.subr.mxu0 0.0
      %368 = vmatpush1.msra.mxu0 0.0
      %369 = vmatprep.subr.mxu0 0.0
      %370 = vmatpush1.msra.mxu0 0.0
      %371 = vmatprep.subr.mxu0 0.0
      %372 = vmatpush1.msra.mxu0 0.0
      %373 = vmatprep.subr.mxu0 0.0
      %374 = vmatpush1.msra.mxu0 0.0
      %375 = vmatprep.subr.mxu0 0.0
      %376 = vmatpush1.msra.mxu0 0.0
      %377 = vmatprep.subr.mxu0 0.0
      %378 = vmatpush1.msra.mxu0 0.0
      %379 = vmatprep.subr.mxu0 0.0
      %380 = vmatpush1.msra.mxu0 0.0
      %381 = vmatprep.subr.mxu0 0.0
      %382 = vmatpush1.msra.mxu0 0.0
      %383 = vmatprep.subr.mxu0 0.0
      %384 = vmatpush1.msra.mxu0 0.0
      %385 = vmatprep.subr.mxu0 0.0
      %386 = vmatpush1.msra.mxu0 0.0
      %387 = vmatprep.subr.mxu0 0.0
      %388 = vmatpush1.msra.mxu0 0.0
      %389 = vmatprep.subr.mxu0 0.0
      %390 = vmatpush1.msra.mxu0 0.0
      %391 = vmatprep.subr.mxu0 0.0
      %392 = vmatpush1.msra.mxu0 0.0
      %393 = vmatprep.subr.mxu0 0.0
      %394 = vmatpush1.msra.mxu0 0.0
      %395 = vmatprep.subr.mxu0 0.0
      %396 = vmatpush1.msra.mxu0 0.0
      %397 = vmatprep.subr.mxu0 0.0
      %398 = vmatpush1.msra.mxu0 0.0
      %399 = vmatprep.subr.mxu0 0.0
      %400 = vmatpush1.msra.mxu0 0.0
      %401 = vmatprep.subr.mxu0 0.0
      %402 = vmatpush1.msra.mxu0 0.0
      %403 = vmatprep.subr.mxu0 0.0
      %404 = vmatpush1.msra.mxu0 0.0
      %405 = vmatprep.subr.mxu0 0.0
      %406 = vmatpush1.msra.mxu0 0.0
      %407 = vmatprep.subr.mxu0 0.0
      %408 = vmatpush1.msra.mxu0 0.0
      %409 = vmatprep.subr.mxu0 0.0
      %410 = vmatpush1.msra.mxu0 0.0
      %411 = vmatprep.subr.mxu0 0.0
      %412 = vmatpush1.msra.mxu0 0.0
      %413 = vmatprep.subr.mxu0 0.0
      %414 = vmatpush1.msra.mxu0 0.0
      %415 = vmatprep.mubr.f32.mxu0 0.0
      %416 = vmatmul.mubr.f32.gmra.mrb[0].mxu0 %v207
      %v417 = vpop.f32.mrb[0].mxu0
      %v418 = vadd.f32 0.0, %v417
      %v419 = vpop.f32.mrb[0].mxu0
      %v420 = vadd.f32 0.0, %v419
      %421 = vdwg.mxu0
      %422 = vmatprep.subr.mxu0 %v196
      %423 = vmatpush1.msra.mxu0 %v195
      %424 = vmatprep.subr.mxu0 %v204
      %425 = vmatpush1.msra.mxu0 %v203
      %426 = vmatprep.subr.mxu0 0.0
      %427 = vmatpush1.msra.mxu0 0.0
      %428 = vmatprep.subr.mxu0 0.0
      %429 = vmatpush1.msra.mxu0 0.0
      %430 = vmatprep.subr.mxu0 0.0
      %431 = vmatpush1.msra.mxu0 0.0
      %432 = vmatprep.subr.mxu0 0.0
      %433 = vmatpush1.msra.mxu0 0.0
      %434 = vmatprep.subr.mxu0 0.0
      %435 = vmatpush1.msra.mxu0 0.0
      %436 = vmatprep.subr.mxu0 0.0
      %437 = vmatpush1.msra.mxu0 0.0
      %438 = vmatprep.subr.mxu0 0.0
      %439 = vmatpush1.msra.mxu0 0.0
      %440 = vmatprep.subr.mxu0 0.0
      %441 = vmatpush1.msra.mxu0 0.0
      %442 = vmatprep.subr.mxu0 0.0
      %443 = vmatpush1.msra.mxu0 0.0
      %444 = vmatprep.subr.mxu0 0.0
      %445 = vmatpush1.msra.mxu0 0.0
      %446 = vmatprep.subr.mxu0 0.0
      %447 = vmatpush1.msra.mxu0 0.0
      %448 = vmatprep.subr.mxu0 0.0
      %449 = vmatpush1.msra.mxu0 0.0
      %450 = vmatprep.subr.mxu0 0.0
      %451 = vmatpush1.msra.mxu0 0.0
      %452 = vmatprep.subr.mxu0 0.0
      %453 = vmatpush1.msra.mxu0 0.0
      %454 = vmatprep.subr.mxu0 0.0
      %455 = vmatpush1.msra.mxu0 0.0
      %456 = vmatprep.subr.mxu0 0.0
      %457 = vmatpush1.msra.mxu0 0.0
      %458 = vmatprep.subr.mxu0 0.0
      %459 = vmatpush1.msra.mxu0 0.0
      %460 = vmatprep.subr.mxu0 0.0
      %461 = vmatpush1.msra.mxu0 0.0
      %462 = vmatprep.subr.mxu0 0.0
      %463 = vmatpush1.msra.mxu0 0.0
      %464 = vmatprep.subr.mxu0 0.0
      %465 = vmatpush1.msra.mxu0 0.0
      %466 = vmatprep.subr.mxu0 0.0
      %467 = vmatpush1.msra.mxu0 0.0
      %468 = vmatprep.subr.mxu0 0.0
      %469 = vmatpush1.msra.mxu0 0.0
      %470 = vmatprep.subr.mxu0 0.0
      %471 = vmatpush1.msra.mxu0 0.0
      %472 = vmatprep.subr.mxu0 0.0
      %473 = vmatpush1.msra.mxu0 0.0
      %474 = vmatprep.subr.mxu0 0.0
      %475 = vmatpush1.msra.mxu0 0.0
      %476 = vmatprep.subr.mxu0 0.0
      %477 = vmatpush1.msra.mxu0 0.0
      %478 = vmatprep.subr.mxu0 0.0
      %479 = vmatpush1.msra.mxu0 0.0
      %480 = vmatprep.subr.mxu0 0.0
      %481 = vmatpush1.msra.mxu0 0.0
      %482 = vmatprep.subr.mxu0 0.0
      %483 = vmatpush1.msra.mxu0 0.0
      %484 = vmatprep.subr.mxu0 0.0
      %485 = vmatpush1.msra.mxu0 0.0
      %486 = vmatprep.mubr.f32.mxu0 0.0
      %487 = vmatmul.mubr.f32.gmra.mrb[0].mxu0 %v207
      %v488 = vpop.f32.mrb[0].mxu0
      %v489 = vadd.f32 0.0, %v488
      %v490 = vpop.f32.mrb[0].mxu0
      %v491 = vadd.f32 0.0, %v490
      %492 = vdwg.mxu0
      %v493 = vld [vmem:[%s178] sm:$0xff]
      %v494 = vld [vmem:[%s178 + $0x8] sm:$0xff]
      %v495 = vld [vmem:[%s178 + $0x10] sm:$0xff]
      %v496 = vld [vmem:[%s178 + $0x18] sm:$0xff]
      %v497 = vld [vmem:[%s178 + $0x20] sm:$0xff]
      %v498 = vld [vmem:[%s178 + $0x28] sm:$0xff]
      %v499 = vld [vmem:[%s178 + $0x30] sm:$0xff]
      %v500 = vld [vmem:[%s178 + $0x38] sm:$0xff]
      %v501 = vmul.f32 %v493, %v276
      %v502 = vmul.f32 %v494, %v278
      %v503 = vmul.f32 %v495, %v347
      %v504 = vmul.f32 %v496, %v349
      %v505 = vmul.f32 %v497, %v418
      %v506 = vmul.f32 %v498, %v420
      %v507 = vmul.f32 %v499, %v489
      %v508 = vmul.f32 %v500, %v491
      %509 = vst [vmem:[%s187] sm:$0xff] %v501
      %510 = vst [vmem:[%s187 + $0x8] sm:$0xff] %v502
      %511 = vst [vmem:[%s187 + $0x10] sm:$0xff] %v503
      %512 = vst [vmem:[%s187 + $0x18] sm:$0xff] %v504
      %513 = vst [vmem:[%s187 + $0x20] sm:$0xff] %v505
      %514 = vst [vmem:[%s187 + $0x28] sm:$0xff] %v506
      %515 = vst [vmem:[%s187 + $0x30] sm:$0xff] %v507
      %516 = vst [vmem:[%s187 + $0x38] sm:$0xff] %v508
      %p517 = scmp.lt.s32.totalorder %s14, 1
      %s518 = scalar_select %p517, %s14, 1
      %s519 = smul.addr %s518, 8
      %s520 = smul.addr %s519, 8
      %s521 = scalar_lea.vmem %s3, %s520
      // Predicated region
      $region33: #{tcja_forward.5} parent=31 // pred_check
        %p522 = pneg %p105
      $region34: #{tcja_forward.5} parent=31 // pred_check_branch
        %524 = sbr.rel (%p522) target = $region36
      $region35: #{tcja_forward.5} parent=31 // pred_region
        _
      $region36: #{tcja_forward.5} parent=31 // pred_fallthru
        _
    $region32: #{tcja_forward.5} parent=5 // pred_fallthru
      _
    %p525 = scmp.le.s32.totalorder 2, %s9
    // Predicated region
    $region37: #{tcja_forward.5} parent=5 // pred_check
      %p526 = pneg %p525
    $region38: #{tcja_forward.5} parent=5 // pred_check_branch
      %528 = sbr.rel (%p526) target = $region40
    $region39: #{tcja_forward.5} parent=5 // pred_region
      %s529 = ssub.s32 %s9, 2
      // Predicated region
      $region41: #{tcja_forward.5} parent=39 // pred_check
        %p530 = pneg %p111
      $region42: #{tcja_forward.5} parent=39 // pred_check_branch
        %532 = sbr.rel (%p530) target = $region44
      $region43: #{tcja_forward.5} parent=39 // pred_region
        %p533 = scmp.lt.s32.totalorder %s15, 1
        %s534 = scalar_select %p533, %s15, 1
        %s535 = smul.addr %s534, 8
        %s536 = smul.addr %s535, 8
        %s537 = scalar_lea.vmem %s3, %s536
      $region44: #{tcja_forward.5} parent=39 // pred_fallthru
        _
    $region40: #{tcja_forward.5} parent=5 // pred_fallthru
      _
  $region6: #{tcja_forward.5} parent=0 // loop_footer
    %s13 = sadd.s32 1, %s9
  $region7: #{tcja_forward.5} parent=0 // loop_footer_branch
    %8 = sbr.rel target = $region3
  $region8: #{tcja_forward.5} parent=0 // loop_exit
    _

// kernel: tcja_forward.4
$region0: #{tcja_forward.4}
  #allocation0 [shape = 'u32[]', space=smem, size = 0x4, offset = 0x4, fixed_abs, tag = 'smem constant byte address 0x4 - core index']
  #allocation1 [shape = 'u32[144,128]{1,0:T(1,128)}', space=vmem, size = 0x12000, scoped, tag = 'internal scratch']
  %s0 = inlined_call_operand.vmem [shape: f32[16,16], index: 0, kind: input, shape index: {}]
  %s1 = inlined_call_operand.vmem [shape: f32[3,16,16], index: 1, kind: input, shape index: {}]
  %s2 = inlined_call_operand.vmem [shape: f32[3,16,16], index: 2, kind: input, shape index: {}]
  %s3 = inlined_call_operand.vmem [shape: f32[3,16,16], index: 3, kind: input, shape index: {}]
  %s4 = inlined_call_operand.vmem [shape: f32[3,16,16], index: 4, kind: input, shape index: {}]
  %s5 = inlined_call_operand.vmem [shape: f32[16,16], index: 5, kind: output, shape index: {}]
  %s6 = sld [smem:[#allocation0]]
  $region30: #{tcja_forward.4} parent=0
    _
  %s8 = ssub.s32 1, %s6
  %s9 = scalar_select 0, %s8, %s6
  // Predicated region
  $region2: #{tcja_forward.4} parent=0 // pred_check
    _
  $region3: #{tcja_forward.4} parent=0 // pred_check_branch
    %11 = sbr.rel (0) target = $region5
  $region4: #{tcja_forward.4} parent=0 // pred_region
    _
  $region5: #{tcja_forward.4} parent=0 // pred_fallthru
    _
  // Predicated region
  $region6: #{tcja_forward.4} parent=0 // pred_check
    _
  $region7: #{tcja_forward.4} parent=0 // pred_check_branch
    %13 = sbr.rel (0) target = $region9
  $region8: #{tcja_forward.4} parent=0 // pred_region
    _
  $region9: #{tcja_forward.4} parent=0 // pred_fallthru
    _
  // Predicated region
  $region10: #{tcja_forward.4} parent=0 // pred_check
    _
  $region11: #{tcja_forward.4} parent=0 // pred_check_branch
    %15 = sbr.rel (0) target = $region13
  $region12: #{tcja_forward.4} parent=0 // pred_region
    _
  $region13: #{tcja_forward.4} parent=0 // pred_fallthru
    _
  // Predicated region
  $region14: #{tcja_forward.4} parent=0 // pred_check
    _
  $region15: #{tcja_forward.4} parent=0 // pred_check_branch
    %17 = sbr.rel (0) target = $region17
  $region16: #{tcja_forward.4} parent=0 // pred_region
    _
  $region17: #{tcja_forward.4} parent=0 // pred_fallthru
    _
  // Predicated region
  $region18: #{tcja_forward.4} parent=0 // pred_check
    _
  $region19: #{tcja_forward.4} parent=0 // pred_check_branch
    %19 = sbr.rel (0) target = $region21
  $region20: #{tcja_forward.4} parent=0 // pred_region
    _
  $region21: #{tcja_forward.4} parent=0 // pred_fallthru
    _
  %v20 = vld [vmem:[%s0] sm:$0xff]
  %v21 = vld [vmem:[%s0 + $0x8] sm:$0xff]
  %v22 = vld [vmem:[%s2] sm:$0xff]
  %v23 = vld [vmem:[%s2 + $0x8] sm:$0xff]
  %vm24 = vcmask 130048
  %v26 = vsel %vm24, %v20, 0
  %v29 = vsel %vm24, %v21, 0
  %31 = vmatprep.subr.mxu0 0.0
  %32 = vmatpush1.msra.mxu0 %v22
  %33 = vmatprep.subr.mxu0 0.0
  %34 = vmatpush1.msra.mxu0 %v23
  %35 = vmatprep.subr.mxu0 0.0
  %36 = vmatpush1.msra.mxu0 0.0
  %37 = vmatprep.subr.mxu0 0.0
  %38 = vmatpush1.msra.mxu0 0.0
  %39 = vmatprep.subr.mxu0 0.0
  %40 = vmatpush1.msra.mxu0 0.0
  %41 = vmatprep.subr.mxu0 0.0
  %42 = vmatpush1.msra.mxu0 0.0
  %43 = vmatprep.subr.mxu0 0.0
  %44 = vmatpush1.msra.mxu0 0.0
  %45 = vmatprep.subr.mxu0 0.0
  %46 = vmatpush1.msra.mxu0 0.0
  %47 = vmatprep.subr.mxu0 0.0
  %48 = vmatpush1.msra.mxu0 0.0
  %49 = vmatprep.subr.mxu0 0.0
  %50 = vmatpush1.msra.mxu0 0.0
  %51 = vmatprep.subr.mxu0 0.0
  %52 = vmatpush1.msra.mxu0 0.0
  %53 = vmatprep.subr.mxu0 0.0
  %54 = vmatpush1.msra.mxu0 0.0
  %55 = vmatprep.subr.mxu0 0.0
  %56 = vmatpush1.msra.mxu0 0.0
  %57 = vmatprep.subr.mxu0 0.0
  %58 = vmatpush1.msra.mxu0 0.0
  %59 = vmatprep.subr.mxu0 0.0
  %60 = vmatpush1.msra.mxu0 0.0
  %61 = vmatprep.subr.mxu0 0.0
  %62 = vmatpush1.msra.mxu0 0.0
  %63 = vmatprep.subr.mxu0 0.0
  %64 = vmatpush1.msra.mxu0 0.0
  %65 = vmatprep.subr.mxu0 0.0
  %66 = vmatpush1.msra.mxu0 0.0
  %67 = vmatprep.subr.mxu0 0.0
  %68 = vmatpush1.msra.mxu0 0.0
  %69 = vmatprep.subr.mxu0 0.0
  %70 = vmatpush1.msra.mxu0 0.0
  %71 = vmatprep.subr.mxu0 0.0
  %72 = vmatpush1.msra.mxu0 0.0
  %73 = vmatprep.subr.mxu0 0.0
  %74 = vmatpush1.msra.mxu0 0.0
  %75 = vmatprep.subr.mxu0 0.0
  %76 = vmatpush1.msra.mxu0 0.0
  %77 = vmatprep.subr.mxu0 0.0
  %78 = vmatpush1.msra.mxu0 0.0
  %79 = vmatprep.subr.mxu0 0.0
  %80 = vmatpush1.msra.mxu0 0.0
  %81 = vmatprep.subr.mxu0 0.0
  %82 = vmatpush1.msra.mxu0 0.0
  %83 = vmatprep.subr.mxu0 0.0
  %84 = vmatpush1.msra.mxu0 0.0
  %85 = vmatprep.subr.mxu0 0.0
  %86 = vmatpush1.msra.mxu0 0.0
  %87 = vmatprep.subr.mxu0 0.0
  %88 = vmatpush1.msra.mxu0 0.0
  %89 = vmatprep.subr.mxu0 0.0
  %90 = vmatpush1.msra.mxu0 0.0
  %91 = vmatprep.subr.mxu0 0.0
  %92 = vmatpush1.msra.mxu0 0.0
  %93 = vmatprep.subr.mxu0 0.0
  %94 = vmatpush1.msra.mxu0 0.0
  %95 = vmatprep.mubr.f32.mxu0 0.0
  %96 = vmatmul.mubr.f32.gmra.mrb[0].mxu0 %v26
  %v97 = vpop.f32.mrb[0].mxu0
  %v98 = vadd.f32 0.0, %v97
  %v99 = vpop.f32.mrb[0].mxu0
  %100 = vmatprep.mubr.f32.mxu0 0.0
  %101 = vmatmul.mubr.f32.gmra.mrb[0].mxu0 %v29
  %v102 = vpop.f32.mrb[0].mxu0
  %v103 = vadd.f32 0.0, %v102
  %v104 = vpop.f32.mrb[0].mxu0
  %105 = vdwg.mxu0
  %v106 = vld [vmem:[%s1] sm:$0xff]
  %v107 = vld [vmem:[%s1 + $0x8] sm:$0xff]
  %s108 = scalar_lea.vmem %s2, 16
  %v109 = vld [vmem:[%s108] sm:$0xff]
  %v110 = vld [vmem:[%s108 + $0x8] sm:$0xff]
  %111 = vmatprep.subr.mxu0 0.0
  %112 = vmatpush1.msra.mxu0 %v109
  %113 = vmatprep.subr.mxu0 0.0
  %114 = vmatpush1.msra.mxu0 %v110
  %115 = vmatprep.subr.mxu0 0.0
  %116 = vmatpush1.msra.mxu0 0.0
  %117 = vmatprep.subr.mxu0 0.0
  %118 = vmatpush1.msra.mxu0 0.0
  %119 = vmatprep.subr.mxu0 0.0
  %120 = vmatpush1.msra.mxu0 0.0
  %121 = vmatprep.subr.mxu0 0.0
  %122 = vmatpush1.msra.mxu0 0.0
  %123 = vmatprep.subr.mxu0 0.0
  %124 = vmatpush1.msra.mxu0 0.0
  %125 = vmatprep.subr.mxu0 0.0
  %126 = vmatpush1.msra.mxu0 0.0
  %127 = vmatprep.subr.mxu0 0.0
  %128 = vmatpush1.msra.mxu0 0.0
  %129 = vmatprep.subr.mxu0 0.0
  %130 = vmatpush1.msra.mxu0 0.0
  %131 = vmatprep.subr.mxu0 0.0
  %132 = vmatpush1.msra.mxu0 0.0
  %133 = vmatprep.subr.mxu0 0.0
  %134 = vmatpush1.msra.mxu0 0.0
  %135 = vmatprep.subr.mxu0 0.0
  %136 = vmatpush1.msra.mxu0 0.0
  %137 = vmatprep.subr.mxu0 0.0
  %138 = vmatpush1.msra.mxu0 0.0
  %139 = vmatprep.subr.mxu0 0.0
  %140 = vmatpush1.msra.mxu0 0.0
  %141 = vmatprep.subr.mxu0 0.0
  %142 = vmatpush1.msra.mxu0 0.0
  %143 = vmatprep.subr.mxu0 0.0
  %144 = vmatpush1.msra.mxu0 0.0
  %145 = vmatprep.subr.mxu0 0.0
  %146 = vmatpush1.msra.mxu0 0.0
  %147 = vmatprep.subr.mxu0 0.0
  %148 = vmatpush1.msra.mxu0 0.0
  %149 = vmatprep.subr.mxu0 0.0
  %150 = vmatpush1.msra.mxu0 0.0
  %151 = vmatprep.subr.mxu0 0.0
  %152 = vmatpush1.msra.mxu0 0.0
  %153 = vmatprep.subr.mxu0 0.0
  %154 = vmatpush1.msra.mxu0 0.0
  %155 = vmatprep.subr.mxu0 0.0
  %156 = vmatpush1.msra.mxu0 0.0
  %157 = vmatprep.subr.mxu0 0.0
  %158 = vmatpush1.msra.mxu0 0.0
  %159 = vmatprep.subr.mxu0 0.0
  %160 = vmatpush1.msra.mxu0 0.0
  %161 = vmatprep.subr.mxu0 0.0
  %162 = vmatpush1.msra.mxu0 0.0
  %163 = vmatprep.subr.mxu0 0.0
  %164 = vmatpush1.msra.mxu0 0.0
  %165 = vmatprep.subr.mxu0 0.0
  %166 = vmatpush1.msra.mxu0 0.0
  %167 = vmatprep.subr.mxu0 0.0
  %168 = vmatpush1.msra.mxu0 0.0
  %169 = vmatprep.subr.mxu0 0.0
  %170 = vmatpush1.msra.mxu0 0.0
  %171 = vmatprep.subr.mxu0 0.0
  %172 = vmatpush1.msra.mxu0 0.0
  %173 = vmatprep.subr.mxu0 0.0
  %174 = vmatpush1.msra.mxu0 0.0
  %175 = vmatprep.mubr.f32.mxu0 0.0
  %176 = vmatmul.mubr.f32.gmra.mrb[0].mxu0 %v26
  %v177 = vpop.f32.mrb[0].mxu0
  %v178 = vadd.f32 0.0, %v177
  %v179 = vpop.f32.mrb[0].mxu0
  %180 = vmatprep.mubr.f32.mxu0 0.0
  %181 = vmatmul.mubr.f32.gmra.mrb[0].mxu0 %v29
  %v182 = vpop.f32.mrb[0].mxu0
  %v183 = vadd.f32 0.0, %v182
  %v184 = vpop.f32.mrb[0].mxu0
  %185 = vdwg.mxu0
  %s186 = scalar_lea.vmem %s1, 16
  %v187 = vld [vmem:[%s186] sm:$0xff]
  %v188 = vld [vmem:[%s186 + $0x8] sm:$0xff]
  %v190 = vsel %vm24, %v187, 0
  %v193 = vsel %vm24, %v188, 0
  %195 = vmatprep.subr.mxu0 0.0
  %196 = vmatpush1.msra.mxu0 %v178
  %197 = vmatprep.subr.mxu0 0.0
  %198 = vmatpush1.msra.mxu0 %v183
  %199 = vmatprep.subr.mxu0 0.0
  %200 = vmatpush1.msra.mxu0 0.0
  %201 = vmatprep.subr.mxu0 0.0
  %202 = vmatpush1.msra.mxu0 0.0
  %203 = vmatprep.subr.mxu0 0.0
  %204 = vmatpush1.msra.mxu0 0.0
  %205 = vmatprep.subr.mxu0 0.0
  %206 = vmatpush1.msra.mxu0 0.0
  %207 = vmatprep.subr.mxu0 0.0
  %208 = vmatpush1.msra.mxu0 0.0
  %209 = vmatprep.subr.mxu0 0.0
  %210 = vmatpush1.msra.mxu0 0.0
  %211 = vmatprep.subr.mxu0 0.0
  %212 = vmatpush1.msra.mxu0 0.0
  %213 = vmatprep.subr.mxu0 0.0
  %214 = vmatpush1.msra.mxu0 0.0
  %215 = vmatprep.subr.mxu0 0.0
  %216 = vmatpush1.msra.mxu0 0.0
  %217 = vmatprep.subr.mxu0 0.0
  %218 = vmatpush1.msra.mxu0 0.0
  %219 = vmatprep.subr.mxu0 0.0
  %220 = vmatpush1.msra.mxu0 0.0
  %221 = vmatprep.subr.mxu0 0.0
  %222 = vmatpush1.msra.mxu0 0.0
  %223 = vmatprep.subr.mxu0 0.0
  %224 = vmatpush1.msra.mxu0 0.0
  %225 = vmatprep.subr.mxu0 0.0
  %226 = vmatpush1.msra.mxu0 0.0
  %227 = vmatprep.subr.mxu0 0.0
  %228 = vmatpush1.msra.mxu0 0.0
  %229 = vmatprep.subr.mxu0 0.0
  %230 = vmatpush1.msra.mxu0 0.0
  %231 = vmatprep.subr.mxu0 0.0
  %232 = vmatpush1.msra.mxu0 0.0
  %233 = vmatprep.subr.mxu0 0.0
  %234 = vmatpush1.msra.mxu0 0.0
  %235 = vmatprep.subr.mxu0 0.0
  %236 = vmatpush1.msra.mxu0 0.0
  %237 = vmatprep.subr.mxu0 0.0
  %238 = vmatpush1.msra.mxu0 0.0
  %239 = vmatprep.subr.mxu0 0.0
  %240 = vmatpush1.msra.mxu0 0.0
  %241 = vmatprep.subr.mxu0 0.0
  %242 = vmatpush1.msra.mxu0 0.0
  %243 = vmatprep.subr.mxu0 0.0
  %244 = vmatpush1.msra.mxu0 0.0
  %245 = vmatprep.subr.mxu0 0.0
  %246 = vmatpush1.msra.mxu0 0.0
  %247 = vmatprep.subr.mxu0 0.0
  %248 = vmatpush1.msra.mxu0 0.0
  %249 = vmatprep.subr.mxu0 0.0
  %250 = vmatpush1.msra.mxu0 0.0
  %251 = vmatprep.subr.mxu0 0.0
  %252 = vmatpush1.msra.mxu0 0.0
  %253 = vmatprep.subr.mxu0 0.0
  %254 = vmatpush1.msra.mxu0 0.0
  %255 = vmatprep.subr.mxu0 0.0
  %256 = vmatpush1.msra.mxu0 0.0
  %257 = vmatprep.subr.mxu0 0.0
  %258 = vmatpush1.msra.mxu0 0.0
  %259 = vmatprep.mubr.f32.mxu0 0.0
  %260 = vmatmul.mubr.f32.gmra.mrb[0].mxu0 %v190
  %v261 = vpop.f32.mrb[0].mxu0
  %v262 = vadd.f32 0.0, %v261
  %v263 = vpop.f32.mrb[0].mxu0
  %264 = vmatprep.mubr.f32.mxu0 0.0
  %265 = vmatmul.mubr.f32.gmra.mrb[0].mxu0 %v193
  %v266 = vpop.f32.mrb[0].mxu0
  %v267 = vadd.f32 0.0, %v266
  %v268 = vpop.f32.mrb[0].mxu0
  %269 = vdwg.mxu0
  %v271 = vsel %vm24, %v106, 0
  %v274 = vsel %vm24, %v107, 0
  %276 = vmatprep.subr.mxu0 0.0
  %277 = vmatpush1.msra.mxu0 %v98
  %278 = vmatprep.subr.mxu0 0.0
  %279 = vmatpush1.msra.mxu0 %v103
  %280 = vmatprep.subr.mxu0 0.0
  %281 = vmatpush1.msra.mxu0 0.0
  %282 = vmatprep.subr.mxu0 0.0
  %283 = vmatpush1.msra.mxu0 0.0
  %284 = vmatprep.subr.mxu0 0.0
  %285 = vmatpush1.msra.mxu0 0.0
  %286 = vmatprep.subr.mxu0 0.0
  %287 = vmatpush1.msra.mxu0 0.0
  %288 = vmatprep.subr.mxu0 0.0
  %289 = vmatpush1.msra.mxu0 0.0
  %290 = vmatprep.subr.mxu0 0.0
  %291 = vmatpush1.msra.mxu0 0.0
  %292 = vmatprep.subr.mxu0 0.0
  %293 = vmatpush1.msra.mxu0 0.0
  %294 = vmatprep.subr.mxu0 0.0
  %295 = vmatpush1.msra.mxu0 0.0
  %296 = vmatprep.subr.mxu0 0.0
  %297 = vmatpush1.msra.mxu0 0.0
  %298 = vmatprep.subr.mxu0 0.0
  %299 = vmatpush1.msra.mxu0 0.0
  %300 = vmatprep.subr.mxu0 0.0
  %301 = vmatpush1.msra.mxu0 0.0
  %302 = vmatprep.subr.mxu0 0.0
  %303 = vmatpush1.msra.mxu0 0.0
  %304 = vmatprep.subr.mxu0 0.0
  %305 = vmatpush1.msra.mxu0 0.0
  %306 = vmatprep.subr.mxu0 0.0
  %307 = vmatpush1.msra.mxu0 0.0
  %308 = vmatprep.subr.mxu0 0.0
  %309 = vmatpush1.msra.mxu0 0.0
  %310 = vmatprep.subr.mxu0 0.0
  %311 = vmatpush1.msra.mxu0 0.0
  %312 = vmatprep.subr.mxu0 0.0
  %313 = vmatpush1.msra.mxu0 0.0
  %314 = vmatprep.subr.mxu0 0.0
  %315 = vmatpush1.msra.mxu0 0.0
  %316 = vmatprep.subr.mxu0 0.0
  %317 = vmatpush1.msra.mxu0 0.0
  %318 = vmatprep.subr.mxu0 0.0
  %319 = vmatpush1.msra.mxu0 0.0
  %320 = vmatprep.subr.mxu0 0.0
  %321 = vmatpush1.msra.mxu0 0.0
  %322 = vmatprep.subr.mxu0 0.0
  %323 = vmatpush1.msra.mxu0 0.0
  %324 = vmatprep.subr.mxu0 0.0
  %325 = vmatpush1.msra.mxu0 0.0
  %326 = vmatprep.subr.mxu0 0.0
  %327 = vmatpush1.msra.mxu0 0.0
  %328 = vmatprep.subr.mxu0 0.0
  %329 = vmatpush1.msra.mxu0 0.0
  %330 = vmatprep.subr.mxu0 0.0
  %331 = vmatpush1.msra.mxu0 0.0
  %332 = vmatprep.subr.mxu0 0.0
  %333 = vmatpush1.msra.mxu0 0.0
  %334 = vmatprep.subr.mxu0 0.0
  %335 = vmatpush1.msra.mxu0 0.0
  %336 = vmatprep.subr.mxu0 0.0
  %337 = vmatpush1.msra.mxu0 0.0
  %338 = vmatprep.subr.mxu0 0.0
  %339 = vmatpush1.msra.mxu0 0.0
  %340 = vmatprep.mubr.f32.mxu0 0.0
  %341 = vmatmul.mubr.f32.gmra.mrb[0].mxu0 %v271
  %v342 = vpop.f32.mrb[0].mxu0
  %v343 = vadd.f32 %v262, %v342
  %v344 = vpop.f32.mrb[0].mxu0
  %345 = vmatprep.mubr.f32.mxu0 0.0
  %346 = vmatmul.mubr.f32.gmra.mrb[0].mxu0 %v274
  %v347 = vpop.f32.mrb[0].mxu0
  %v348 = vadd.f32 %v267, %v347
  %v349 = vpop.f32.mrb[0].mxu0
  %350 = vdwg.mxu0
  %s351 = scalar_lea.vmem %s2, 32
  %v352 = vld [vmem:[%s351] sm:$0xff]
  %v353 = vld [vmem:[%s351 + $0x8] sm:$0xff]
  %354 = vmatprep.subr.mxu0 0.0
  %355 = vmatpush1.msra.mxu0 %v352
  %356 = vmatprep.subr.mxu0 0.0
  %357 = vmatpush1.msra.mxu0 %v353
  %358 = vmatprep.subr.mxu0 0.0
  %359 = vmatpush1.msra.mxu0 0.0
  %360 = vmatprep.subr.mxu0 0.0
  %361 = vmatpush1.msra.mxu0 0.0
  %362 = vmatprep.subr.mxu0 0.0
  %363 = vmatpush1.msra.mxu0 0.0
  %364 = vmatprep.subr.mxu0 0.0
  %365 = vmatpush1.msra.mxu0 0.0
  %366 = vmatprep.subr.mxu0 0.0
  %367 = vmatpush1.msra.mxu0 0.0
  %368 = vmatprep.subr.mxu0 0.0
  %369 = vmatpush1.msra.mxu0 0.0
  %370 = vmatprep.subr.mxu0 0.0
  %371 = vmatpush1.msra.mxu0 0.0
  %372 = vmatprep.subr.mxu0 0.0
  %373 = vmatpush1.msra.mxu0 0.0
  %374 = vmatprep.subr.mxu0 0.0
  %375 = vmatpush1.msra.mxu0 0.0
  %376 = vmatprep.subr.mxu0 0.0
  %377 = vmatpush1.msra.mxu0 0.0
  %378 = vmatprep.subr.mxu0 0.0
  %379 = vmatpush1.msra.mxu0 0.0
  %380 = vmatprep.subr.mxu0 0.0
  %381 = vmatpush1.msra.mxu0 0.0
  %382 = vmatprep.subr.mxu0 0.0
  %383 = vmatpush1.msra.mxu0 0.0
  %384 = vmatprep.subr.mxu0 0.0
  %385 = vmatpush1.msra.mxu0 0.0
  %386 = vmatprep.subr.mxu0 0.0
  %387 = vmatpush1.msra.mxu0 0.0
  %388 = vmatprep.subr.mxu0 0.0
  %389 = vmatpush1.msra.mxu0 0.0
  %390 = vmatprep.subr.mxu0 0.0
  %391 = vmatpush1.msra.mxu0 0.0
  %392 = vmatprep.subr.mxu0 0.0
  %393 = vmatpush1.msra.mxu0 0.0
  %394 = vmatprep.subr.mxu0 0.0
  %395 = vmatpush1.msra.mxu0 0.0
  %396 = vmatprep.subr.mxu0 0.0
  %397 = vmatpush1.msra.mxu0 0.0
  %398 = vmatprep.subr.mxu0 0.0
  %399 = vmatpush1.msra.mxu0 0.0
  %400 = vmatprep.subr.mxu0 0.0
  %401 = vmatpush1.msra.mxu0 0.0
  %402 = vmatprep.subr.mxu0 0.0
  %403 = vmatpush1.msra.mxu0 0.0
  %404 = vmatprep.subr.mxu0 0.0
  %405 = vmatpush1.msra.mxu0 0.0
  %406 = vmatprep.subr.mxu0 0.0
  %407 = vmatpush1.msra.mxu0 0.0
  %408 = vmatprep.subr.mxu0 0.0
  %409 = vmatpush1.msra.mxu0 0.0
  %410 = vmatprep.subr.mxu0 0.0
  %411 = vmatpush1.msra.mxu0 0.0
  %412 = vmatprep.subr.mxu0 0.0
  %413 = vmatpush1.msra.mxu0 0.0
  %414 = vmatprep.subr.mxu0 0.0
  %415 = vmatpush1.msra.mxu0 0.0
  %416 = vmatprep.subr.mxu0 0.0
  %417 = vmatpush1.msra.mxu0 0.0
  %418 = vmatprep.mubr.f32.mxu0 0.0
  %419 = vmatmul.mubr.f32.gmra.mrb[0].mxu0 %v26
  %v420 = vpop.f32.mrb[0].mxu0
  %v421 = vadd.f32 0.0, %v420
  %v422 = vpop.f32.mrb[0].mxu0
  %423 = vmatprep.mubr.f32.mxu0 0.0
  %424 = vmatmul.mubr.f32.gmra.mrb[0].mxu0 %v29
  %v425 = vpop.f32.mrb[0].mxu0
  %v426 = vadd.f32 0.0, %v425
  %v427 = vpop.f32.mrb[0].mxu0
  %428 = vdwg.mxu0
  %s429 = scalar_lea.vmem %s1, 32
  %v430 = vld [vmem:[%s429] sm:$0xff]
  %v431 = vld [vmem:[%s429 + $0x8] sm:$0xff]
  %v433 = vsel %vm24, %v430, 0
  %v436 = vsel %vm24, %v431, 0
  %438 = vmatprep.subr.mxu0 0.0
  %439 = vmatpush1.msra.mxu0 %v421
  %440 = vmatprep.subr.mxu0 0.0
  %441 = vmatpush1.msra.mxu0 %v426
  %442 = vmatprep.subr.mxu0 0.0
  %443 = vmatpush1.msra.mxu0 0.0
  %444 = vmatprep.subr.mxu0 0.0
  %445 = vmatpush1.msra.mxu0 0.0
  %446 = vmatprep.subr.mxu0 0.0
  %447 = vmatpush1.msra.mxu0 0.0
  %448 = vmatprep.subr.mxu0 0.0
  %449 = vmatpush1.msra.mxu0 0.0
  %450 = vmatprep.subr.mxu0 0.0
  %451 = vmatpush1.msra.mxu0 0.0
  %452 = vmatprep.subr.mxu0 0.0
  %453 = vmatpush1.msra.mxu0 0.0
  %454 = vmatprep.subr.mxu0 0.0
  %455 = vmatpush1.msra.mxu0 0.0
  %456 = vmatprep.subr.mxu0 0.0
  %457 = vmatpush1.msra.mxu0 0.0
  %458 = vmatprep.subr.mxu0 0.0
  %459 = vmatpush1.msra.mxu0 0.0
  %460 = vmatprep.subr.mxu0 0.0
  %461 = vmatpush1.msra.mxu0 0.0
  %462 = vmatprep.subr.mxu0 0.0
  %463 = vmatpush1.msra.mxu0 0.0
  %464 = vmatprep.subr.mxu0 0.0
  %465 = vmatpush1.msra.mxu0 0.0
  %466 = vmatprep.subr.mxu0 0.0
  %467 = vmatpush1.msra.mxu0 0.0
  %468 = vmatprep.subr.mxu0 0.0
  %469 = vmatpush1.msra.mxu0 0.0
  %470 = vmatprep.subr.mxu0 0.0
  %471 = vmatpush1.msra.mxu0 0.0
  %472 = vmatprep.subr.mxu0 0.0
  %473 = vmatpush1.msra.mxu0 0.0
  %474 = vmatprep.subr.mxu0 0.0
  %475 = vmatpush1.msra.mxu0 0.0
  %476 = vmatprep.subr.mxu0 0.0
  %477 = vmatpush1.msra.mxu0 0.0
  %478 = vmatprep.subr.mxu0 0.0
  %479 = vmatpush1.msra.mxu0 0.0
  %480 = vmatprep.subr.mxu0 0.0
  %481 = vmatpush1.msra.mxu0 0.0
  %482 = vmatprep.subr.mxu0 0.0
  %483 = vmatpush1.msra.mxu0 0.0
  %484 = vmatprep.subr.mxu0 0.0
  %485 = vmatpush1.msra.mxu0 0.0
  %486 = vmatprep.subr.mxu0 0.0
  %487 = vmatpush1.msra.mxu0 0.0
  %488 = vmatprep.subr.mxu0 0.0
  %489 = vmatpush1.msra.mxu0 0.0
  %490 = vmatprep.subr.mxu0 0.0
  %491 = vmatpush1.msra.mxu0 0.0
  %492 = vmatprep.subr.mxu0 0.0
  %493 = vmatpush1.msra.mxu0 0.0
  %494 = vmatprep.subr.mxu0 0.0
  %495 = vmatpush1.msra.mxu0 0.0
  %496 = vmatprep.subr.mxu0 0.0
  %497 = vmatpush1.msra.mxu0 0.0
  %498 = vmatprep.subr.mxu0 0.0
  %499 = vmatpush1.msra.mxu0 0.0
  %500 = vmatprep.subr.mxu0 0.0
  %501 = vmatpush1.msra.mxu0 0.0
  %502 = vmatprep.mubr.f32.mxu0 0.0
  %503 = vmatmul.mubr.f32.gmra.mrb[0].mxu0 %v433
  %v504 = vpop.f32.mrb[0].mxu0
  %v505 = vadd.f32 0.0, %v504
  %v506 = vpop.f32.mrb[0].mxu0
  %507 = vmatprep.mubr.f32.mxu0 0.0
  %508 = vmatmul.mubr.f32.gmra.mrb[0].mxu0 %v436
  %v509 = vpop.f32.mrb[0].mxu0
  %v510 = vadd.f32 0.0, %v509
  %v511 = vpop.f32.mrb[0].mxu0
  %512 = vdwg.mxu0
  %v513 = vadd.f32 %v343, %v505
  %v514 = vadd.f32 %v348, %v510
  %v515 = vld [vmem:[%s3] sm:$0xff]
  %v516 = vld [vmem:[%s3 + $0x8] sm:$0xff]
  %v518 = vsel %vm24, %v515, 0
  %v521 = vsel %vm24, %v516, 0
  %523 = vmatprep.subr.mxu0 0.0
  %524 = vmatpush1.msra.mxu0 %v20
  %525 = vmatprep.subr.mxu0 0.0
  %526 = vmatpush1.msra.mxu0 %v21
  %527 = vmatprep.subr.mxu0 0.0
  %528 = vmatpush1.msra.mxu0 0.0
  %529 = vmatprep.subr.mxu0 0.0
  %530 = vmatpush1.msra.mxu0 0.0
  %531 = vmatprep.subr.mxu0 0.0
  %532 = vmatpush1.msra.mxu0 0.0
  %533 = vmatprep.subr.mxu0 0.0
  %534 = vmatpush1.msra.mxu0 0.0
  %535 = vmatprep.subr.mxu0 0.0
  %536 = vmatpush1.msra.mxu0 0.0
  %537 = vmatprep.subr.mxu0 0.0
  %538 = vmatpush1.msra.mxu0 0.0
  %539 = vmatprep.subr.mxu0 0.0
  %540 = vmatpush1.msra.mxu0 0.0
  %541 = vmatprep.subr.mxu0 0.0
  %542 = vmatpush1.msra.mxu0 0.0
  %543 = vmatprep.subr.mxu0 0.0
  %544 = vmatpush1.msra.mxu0 0.0
  %545 = vmatprep.subr.mxu0 0.0
  %546 = vmatpush1.msra.mxu0 0.0
  %547 = vmatprep.subr.mxu0 0.0
  %548 = vmatpush1.msra.mxu0 0.0
  %549 = vmatprep.subr.mxu0 0.0
  %550 = vmatpush1.msra.mxu0 0.0
  %551 = vmatprep.subr.mxu0 0.0
  %552 = vmatpush1.msra.mxu0 0.0
  %553 = vmatprep.subr.mxu0 0.0
  %554 = vmatpush1.msra.mxu0 0.0
  %555 = vmatprep.subr.mxu0 0.0
  %556 = vmatpush1.msra.mxu0 0.0
  %557 = vmatprep.subr.mxu0 0.0
  %558 = vmatpush1.msra.mxu0 0.0
  %559 = vmatprep.subr.mxu0 0.0
  %560 = vmatpush1.msra.mxu0 0.0
  %561 = vmatprep.subr.mxu0 0.0
  %562 = vmatpush1.msra.mxu0 0.0
  %563 = vmatprep.subr.mxu0 0.0
  %564 = vmatpush1.msra.mxu0 0.0
  %565 = vmatprep.subr.mxu0 0.0
  %566 = vmatpush1.msra.mxu0 0.0
  %567 = vmatprep.subr.mxu0 0.0
  %568 = vmatpush1.msra.mxu0 0.0
  %569 = vmatprep.subr.mxu0 0.0
  %570 = vmatpush1.msra.mxu0 0.0
  %571 = vmatprep.subr.mxu0 0.0
  %572 = vmatpush1.msra.mxu0 0.0
  %573 = vmatprep.subr.mxu0 0.0
  %574 = vmatpush1.msra.mxu0 0.0
  %575 = vmatprep.subr.mxu0 0.0
  %576 = vmatpush1.msra.mxu0 0.0
  %577 = vmatprep.subr.mxu0 0.0
  %578 = vmatpush1.msra.mxu0 0.0
  %579 = vmatprep.subr.mxu0 0.0
  %580 = vmatpush1.msra.mxu0 0.0
  %581 = vmatprep.subr.mxu0 0.0
  %582 = vmatpush1.msra.mxu0 0.0
  %583 = vmatprep.subr.mxu0 0.0
  %584 = vmatpush1.msra.mxu0 0.0
  %585 = vmatprep.subr.mxu0 0.0
  %586 = vmatpush1.msra.mxu0 0.0
  %587 = vmatprep.mubr.f32.mxu0 0.0
  %588 = vmatmul.mubr.f32.gmra.mrb[0].mxu0 %v518
  %v589 = vpop.f32.mrb[0].mxu0
  %v590 = vadd.f32 0.0, %v589
  %v591 = vpop.f32.mrb[0].mxu0
  %592 = vmatprep.mubr.f32.mxu0 0.0
  %593 = vmatmul.mubr.f32.gmra.mrb[0].mxu0 %v521
  %v594 = vpop.f32.mrb[0].mxu0
  %v595 = vadd.f32 0.0, %v594
  %v596 = vpop.f32.mrb[0].mxu0
  %597 = vdwg.mxu0
  %v598 = vld [vmem:[%s4] sm:$0xff]
  %v599 = vld [vmem:[%s4 + $0x8] sm:$0xff]
  %s600 = scalar_lea.vmem %s3, 16
  %v601 = vld [vmem:[%s600] sm:$0xff]
  %v602 = vld [vmem:[%s600 + $0x8] sm:$0xff]
  %v604 = vsel %vm24, %v601, 0
  %v607 = vsel %vm24, %v602, 0
  %609 = vmatprep.subr.mxu0 0.0
  %610 = vmatpush1.msra.mxu0 %v20
  %611 = vmatprep.subr.mxu0 0.0
  %612 = vmatpush1.msra.mxu0 %v21
  %613 = vmatprep.subr.mxu0 0.0
  %614 = vmatpush1.msra.mxu0 0.0
  %615 = vmatprep.subr.mxu0 0.0
  %616 = vmatpush1.msra.mxu0 0.0
  %617 = vmatprep.subr.mxu0 0.0
  %618 = vmatpush1.msra.mxu0 0.0
  %619 = vmatprep.subr.mxu0 0.0
  %620 = vmatpush1.msra.mxu0 0.0
  %621 = vmatprep.subr.mxu0 0.0
  %622 = vmatpush1.msra.mxu0 0.0
  %623 = vmatprep.subr.mxu0 0.0
  %624 = vmatpush1.msra.mxu0 0.0
  %625 = vmatprep.subr.mxu0 0.0
  %626 = vmatpush1.msra.mxu0 0.0
  %627 = vmatprep.subr.mxu0 0.0
  %628 = vmatpush1.msra.mxu0 0.0
  %629 = vmatprep.subr.mxu0 0.0
  %630 = vmatpush1.msra.mxu0 0.0
  %631 = vmatprep.subr.mxu0 0.0
  %632 = vmatpush1.msra.mxu0 0.0
  %633 = vmatprep.subr.mxu0 0.0
  %634 = vmatpush1.msra.mxu0 0.0
  %635 = vmatprep.subr.mxu0 0.0
  %636 = vmatpush1.msra.mxu0 0.0
  %637 = vmatprep.subr.mxu0 0.0
  %638 = vmatpush1.msra.mxu0 0.0
  %639 = vmatprep.subr.mxu0 0.0
  %640 = vmatpush1.msra.mxu0 0.0
  %641 = vmatprep.subr.mxu0 0.0
  %642 = vmatpush1.msra.mxu0 0.0
  %643 = vmatprep.subr.mxu0 0.0
  %644 = vmatpush1.msra.mxu0 0.0
  %645 = vmatprep.subr.mxu0 0.0
  %646 = vmatpush1.msra.mxu0 0.0
  %647 = vmatprep.subr.mxu0 0.0
  %648 = vmatpush1.msra.mxu0 0.0
  %649 = vmatprep.subr.mxu0 0.0
  %650 = vmatpush1.msra.mxu0 0.0
  %651 = vmatprep.subr.mxu0 0.0
  %652 = vmatpush1.msra.mxu0 0.0
  %653 = vmatprep.subr.mxu0 0.0
  %654 = vmatpush1.msra.mxu0 0.0
  %655 = vmatprep.subr.mxu0 0.0
  %656 = vmatpush1.msra.mxu0 0.0
  %657 = vmatprep.subr.mxu0 0.0
  %658 = vmatpush1.msra.mxu0 0.0
  %659 = vmatprep.subr.mxu0 0.0
  %660 = vmatpush1.msra.mxu0 0.0
  %661 = vmatprep.subr.mxu0 0.0
  %662 = vmatpush1.msra.mxu0 0.0
  %663 = vmatprep.subr.mxu0 0.0
  %664 = vmatpush1.msra.mxu0 0.0
  %665 = vmatprep.subr.mxu0 0.0
  %666 = vmatpush1.msra.mxu0 0.0
  %667 = vmatprep.subr.mxu0 0.0
  %668 = vmatpush1.msra.mxu0 0.0
  %669 = vmatprep.subr.mxu0 0.0
  %670 = vmatpush1.msra.mxu0 0.0
  %671 = vmatprep.subr.mxu0 0.0
  %672 = vmatpush1.msra.mxu0 0.0
  %673 = vmatprep.mubr.f32.mxu0 0.0
  %674 = vmatmul.mubr.f32.gmra.mrb[0].mxu0 %v604
  %v675 = vpop.f32.mrb[0].mxu0
  %v676 = vadd.f32 0.0, %v675
  %v677 = vpop.f32.mrb[0].mxu0
  %678 = vmatprep.mubr.f32.mxu0 0.0
  %679 = vmatmul.mubr.f32.gmra.mrb[0].mxu0 %v607
  %v680 = vpop.f32.mrb[0].mxu0
  %v681 = vadd.f32 0.0, %v680
  %v682 = vpop.f32.mrb[0].mxu0
  %683 = vdwg.mxu0
  %s684 = scalar_lea.vmem %s4, 16
  %v685 = vld [vmem:[%s684] sm:$0xff]
  %v686 = vld [vmem:[%s684 + $0x8] sm:$0xff]
  %v688 = vsel %vm24, %v676, 0
  %v691 = vsel %vm24, %v681, 0
  %693 = vmatprep.subr.mxu0 0.0
  %694 = vmatpush1.msra.mxu0 %v685
  %695 = vmatprep.subr.mxu0 0.0
  %696 = vmatpush1.msra.mxu0 %v686
  %697 = vmatprep.subr.mxu0 0.0
  %698 = vmatpush1.msra.mxu0 0.0
  %699 = vmatprep.subr.mxu0 0.0
  %700 = vmatpush1.msra.mxu0 0.0
  %701 = vmatprep.subr.mxu0 0.0
  %702 = vmatpush1.msra.mxu0 0.0
  %703 = vmatprep.subr.mxu0 0.0
  %704 = vmatpush1.msra.mxu0 0.0
  %705 = vmatprep.subr.mxu0 0.0
  %706 = vmatpush1.msra.mxu0 0.0
  %707 = vmatprep.subr.mxu0 0.0
  %708 = vmatpush1.msra.mxu0 0.0
  %709 = vmatprep.subr.mxu0 0.0
  %710 = vmatpush1.msra.mxu0 0.0
  %711 = vmatprep.subr.mxu0 0.0
  %712 = vmatpush1.msra.mxu0 0.0
  %713 = vmatprep.subr.mxu0 0.0
  %714 = vmatpush1.msra.mxu0 0.0
  %715 = vmatprep.subr.mxu0 0.0
  %716 = vmatpush1.msra.mxu0 0.0
  %717 = vmatprep.subr.mxu0 0.0
  %718 = vmatpush1.msra.mxu0 0.0
  %719 = vmatprep.subr.mxu0 0.0
  %720 = vmatpush1.msra.mxu0 0.0
  %721 = vmatprep.subr.mxu0 0.0
  %722 = vmatpush1.msra.mxu0 0.0
  %723 = vmatprep.subr.mxu0 0.0
  %724 = vmatpush1.msra.mxu0 0.0
  %725 = vmatprep.subr.mxu0 0.0
  %726 = vmatpush1.msra.mxu0 0.0
  %727 = vmatprep.subr.mxu0 0.0
  %728 = vmatpush1.msra.mxu0 0.0
  %729 = vmatprep.subr.mxu0 0.0
  %730 = vmatpush1.msra.mxu0 0.0
  %731 = vmatprep.subr.mxu0 0.0
  %732 = vmatpush1.msra.mxu0 0.0
  %733 = vmatprep.subr.mxu0 0.0
  %734 = vmatpush1.msra.mxu0 0.0
  %735 = vmatprep.subr.mxu0 0.0
  %736 = vmatpush1.msra.mxu0 0.0
  %737 = vmatprep.subr.mxu0 0.0
  %738 = vmatpush1.msra.mxu0 0.0
  %739 = vmatprep.subr.mxu0 0.0
  %740 = vmatpush1.msra.mxu0 0.0
  %741 = vmatprep.subr.mxu0 0.0
  %742 = vmatpush1.msra.mxu0 0.0
  %743 = vmatprep.subr.mxu0 0.0
  %744 = vmatpush1.msra.mxu0 0.0
  %745 = vmatprep.subr.mxu0 0.0
  %746 = vmatpush1.msra.mxu0 0.0
  %747 = vmatprep.subr.mxu0 0.0
  %748 = vmatpush1.msra.mxu0 0.0
  %749 = vmatprep.subr.mxu0 0.0
  %750 = vmatpush1.msra.mxu0 0.0
  %751 = vmatprep.subr.mxu0 0.0
  %752 = vmatpush1.msra.mxu0 0.0
  %753 = vmatprep.subr.mxu0 0.0
  %754 = vmatpush1.msra.mxu0 0.0
  %755 = vmatprep.subr.mxu0 0.0
  %756 = vmatpush1.msra.mxu0 0.0
  %757 = vmatprep.mubr.f32.mxu0 0.0
  %758 = vmatmul.mubr.f32.gmra.mrb[0].mxu0 %v688
  %v759 = vpop.f32.mrb[0].mxu0
  %v760 = vadd.f32 0.0, %v759
  %v761 = vpop.f32.mrb[0].mxu0
  %762 = vmatprep.mubr.f32.mxu0 0.0
  %763 = vmatmul.mubr.f32.gmra.mrb[0].mxu0 %v691
  %v764 = vpop.f32.mrb[0].mxu0
  %v765 = vadd.f32 0.0, %v764
  %v766 = vpop.f32.mrb[0].mxu0
  %767 = vdwg.mxu0
  %v769 = vsel %vm24, %v590, 0
  %v772 = vsel %vm24, %v595, 0
  %774 = vmatprep.subr.mxu0 0.0
  %775 = vmatpush1.msra.mxu0 %v598
  %776 = vmatprep.subr.mxu0 0.0
  %777 = vmatpush1.msra.mxu0 %v599
  %778 = vmatprep.subr.mxu0 0.0
  %779 = vmatpush1.msra.mxu0 0.0
  %780 = vmatprep.subr.mxu0 0.0
  %781 = vmatpush1.msra.mxu0 0.0
  %782 = vmatprep.subr.mxu0 0.0
  %783 = vmatpush1.msra.mxu0 0.0
  %784 = vmatprep.subr.mxu0 0.0
  %785 = vmatpush1.msra.mxu0 0.0
  %786 = vmatprep.subr.mxu0 0.0
  %787 = vmatpush1.msra.mxu0 0.0
  %788 = vmatprep.subr.mxu0 0.0
  %789 = vmatpush1.msra.mxu0 0.0
  %790 = vmatprep.subr.mxu0 0.0
  %791 = vmatpush1.msra.mxu0 0.0
  %792 = vmatprep.subr.mxu0 0.0
  %793 = vmatpush1.msra.mxu0 0.0
  %794 = vmatprep.subr.mxu0 0.0
  %795 = vmatpush1.msra.mxu0 0.0
  %796 = vmatprep.subr.mxu0 0.0
  %797 = vmatpush1.msra.mxu0 0.0
  %798 = vmatprep.subr.mxu0 0.0
  %799 = vmatpush1.msra.mxu0 0.0
  %800 = vmatprep.subr.mxu0 0.0
  %801 = vmatpush1.msra.mxu0 0.0
  %802 = vmatprep.subr.mxu0 0.0
  %803 = vmatpush1.msra.mxu0 0.0
  %804 = vmatprep.subr.mxu0 0.0
  %805 = vmatpush1.msra.mxu0 0.0
  %806 = vmatprep.subr.mxu0 0.0
  %807 = vmatpush1.msra.mxu0 0.0
  %808 = vmatprep.subr.mxu0 0.0
  %809 = vmatpush1.msra.mxu0 0.0
  %810 = vmatprep.subr.mxu0 0.0
  %811 = vmatpush1.msra.mxu0 0.0
  %812 = vmatprep.subr.mxu0 0.0
  %813 = vmatpush1.msra.mxu0 0.0
  %814 = vmatprep.subr.mxu0 0.0
  %815 = vmatpush1.msra.mxu0 0.0
  %816 = vmatprep.subr.mxu0 0.0
  %817 = vmatpush1.msra.mxu0 0.0
  %818 = vmatprep.subr.mxu0 0.0
  %819 = vmatpush1.msra.mxu0 0.0
  %820 = vmatprep.subr.mxu0 0.0
  %821 = vmatpush1.msra.mxu0 0.0
  %822 = vmatprep.subr.mxu0 0.0
  %823 = vmatpush1.msra.mxu0 0.0
  %824 = vmatprep.subr.mxu0 0.0
  %825 = vmatpush1.msra.mxu0 0.0
  %826 = vmatprep.subr.mxu0 0.0
  %827 = vmatpush1.msra.mxu0 0.0
  %828 = vmatprep.subr.mxu0 0.0
  %829 = vmatpush1.msra.mxu0 0.0
  %830 = vmatprep.subr.mxu0 0.0
  %831 = vmatpush1.msra.mxu0 0.0
  %832 = vmatprep.subr.mxu0 0.0
  %833 = vmatpush1.msra.mxu0 0.0
  %834 = vmatprep.subr.mxu0 0.0
  %835 = vmatpush1.msra.mxu0 0.0
  %836 = vmatprep.subr.mxu0 0.0
  %837 = vmatpush1.msra.mxu0 0.0
  %838 = vmatprep.mubr.f32.mxu0 0.0
  %839 = vmatmul.mubr.f32.gmra.mrb[0].mxu0 %v769
  %v840 = vpop.f32.mrb[0].mxu0
  %v841 = vadd.f32 %v760, %v840
  %v842 = vpop.f32.mrb[0].mxu0
  %843 = vmatprep.mubr.f32.mxu0 0.0
  %844 = vmatmul.mubr.f32.gmra.mrb[0].mxu0 %v772
  %v845 = vpop.f32.mrb[0].mxu0
  %v846 = vadd.f32 %v765, %v845
  %v847 = vpop.f32.mrb[0].mxu0
  %848 = vdwg.mxu0
  %s849 = scalar_lea.vmem %s3, 32
  %v850 = vld [vmem:[%s849] sm:$0xff]
  %v851 = vld [vmem:[%s849 + $0x8] sm:$0xff]
  %v853 = vsel %vm24, %v850, 0
  %v856 = vsel %vm24, %v851, 0
  %858 = vmatprep.subr.mxu0 0.0
  %859 = vmatpush1.msra.mxu0 %v20
  %860 = vmatprep.subr.mxu0 0.0
  %861 = vmatpush1.msra.mxu0 %v21
  %862 = vmatprep.subr.mxu0 0.0
  %863 = vmatpush1.msra.mxu0 0.0
  %864 = vmatprep.subr.mxu0 0.0
  %865 = vmatpush1.msra.mxu0 0.0
  %866 = vmatprep.subr.mxu0 0.0
  %867 = vmatpush1.msra.mxu0 0.0
  %868 = vmatprep.subr.mxu0 0.0
  %869 = vmatpush1.msra.mxu0 0.0
  %870 = vmatprep.subr.mxu0 0.0
  %871 = vmatpush1.msra.mxu0 0.0
  %872 = vmatprep.subr.mxu0 0.0
  %873 = vmatpush1.msra.mxu0 0.0
  %874 = vmatprep.subr.mxu0 0.0
  %875 = vmatpush1.msra.mxu0 0.0
  %876 = vmatprep.subr.mxu0 0.0
  %877 = vmatpush1.msra.mxu0 0.0
  %878 = vmatprep.subr.mxu0 0.0
  %879 = vmatpush1.msra.mxu0 0.0
  %880 = vmatprep.subr.mxu0 0.0
  %881 = vmatpush1.msra.mxu0 0.0
  %882 = vmatprep.subr.mxu0 0.0
  %883 = vmatpush1.msra.mxu0 0.0
  %884 = vmatprep.subr.mxu0 0.0
  %885 = vmatpush1.msra.mxu0 0.0
  %886 = vmatprep.subr.mxu0 0.0
  %887 = vmatpush1.msra.mxu0 0.0
  %888 = vmatprep.subr.mxu0 0.0
  %889 = vmatpush1.msra.mxu0 0.0
  %890 = vmatprep.subr.mxu0 0.0
  %891 = vmatpush1.msra.mxu0 0.0
  %892 = vmatprep.subr.mxu0 0.0
  %893 = vmatpush1.msra.mxu0 0.0
  %894 = vmatprep.subr.mxu0 0.0
  %895 = vmatpush1.msra.mxu0 0.0
  %896 = vmatprep.subr.mxu0 0.0
  %897 = vmatpush1.msra.mxu0 0.0
  %898 = vmatprep.subr.mxu0 0.0
  %899 = vmatpush1.msra.mxu0 0.0
  %900 = vmatprep.subr.mxu0 0.0
  %901 = vmatpush1.msra.mxu0 0.0
  %902 = vmatprep.subr.mxu0 0.0
  %903 = vmatpush1.msra.mxu0 0.0
  %904 = vmatprep.subr.mxu0 0.0
  %905 = vmatpush1.msra.mxu0 0.0
  %906 = vmatprep.subr.mxu0 0.0
  %907 = vmatpush1.msra.mxu0 0.0
  %908 = vmatprep.subr.mxu0 0.0
  %909 = vmatpush1.msra.mxu0 0.0
  %910 = vmatprep.subr.mxu0 0.0
  %911 = vmatpush1.msra.mxu0 0.0
  %912 = vmatprep.subr.mxu0 0.0
  %913 = vmatpush1.msra.mxu0 0.0
  %914 = vmatprep.subr.mxu0 0.0
  %915 = vmatpush1.msra.mxu0 0.0
  %916 = vmatprep.subr.mxu0 0.0
  %917 = vmatpush1.msra.mxu0 0.0
  %918 = vmatprep.subr.mxu0 0.0
  %919 = vmatpush1.msra.mxu0 0.0
  %920 = vmatprep.subr.mxu0 0.0
  %921 = vmatpush1.msra.mxu0 0.0
  %922 = vmatprep.mubr.f32.mxu0 0.0
  %923 = vmatmul.mubr.f32.gmra.mrb[0].mxu0 %v853
  %v924 = vpop.f32.mrb[0].mxu0
  %v925 = vadd.f32 0.0, %v924
  %v926 = vpop.f32.mrb[0].mxu0
  %927 = vmatprep.mubr.f32.mxu0 0.0
  %928 = vmatmul.mubr.f32.gmra.mrb[0].mxu0 %v856
  %v929 = vpop.f32.mrb[0].mxu0
  %v930 = vadd.f32 0.0, %v929
  %v931 = vpop.f32.mrb[0].mxu0
  %932 = vdwg.mxu0
  %s933 = scalar_lea.vmem %s4, 32
  %v934 = vld [vmem:[%s933] sm:$0xff]
  %v935 = vld [vmem:[%s933 + $0x8] sm:$0xff]
  %v937 = vsel %vm24, %v925, 0
  %v940 = vsel %vm24, %v930, 0
  %942 = vmatprep.subr.mxu0 0.0
  %943 = vmatpush1.msra.mxu0 %v934
  %944 = vmatprep.subr.mxu0 0.0
  %945 = vmatpush1.msra.mxu0 %v935
  %946 = vmatprep.subr.mxu0 0.0
  %947 = vmatpush1.msra.mxu0 0.0
  %948 = vmatprep.subr.mxu0 0.0
  %949 = vmatpush1.msra.mxu0 0.0
  %950 = vmatprep.subr.mxu0 0.0
  %951 = vmatpush1.msra.mxu0 0.0
  %952 = vmatprep.subr.mxu0 0.0
  %953 = vmatpush1.msra.mxu0 0.0
  %954 = vmatprep.subr.mxu0 0.0
  %955 = vmatpush1.msra.mxu0 0.0
  %956 = vmatprep.subr.mxu0 0.0
  %957 = vmatpush1.msra.mxu0 0.0
  %958 = vmatprep.subr.mxu0 0.0
  %959 = vmatpush1.msra.mxu0 0.0
  %960 = vmatprep.subr.mxu0 0.0
  %961 = vmatpush1.msra.mxu0 0.0
  %962 = vmatprep.subr.mxu0 0.0
  %963 = vmatpush1.msra.mxu0 0.0
  %964 = vmatprep.subr.mxu0 0.0
  %965 = vmatpush1.msra.mxu0 0.0
  %966 = vmatprep.subr.mxu0 0.0
  %967 = vmatpush1.msra.mxu0 0.0
  %968 = vmatprep.subr.mxu0 0.0
  %969 = vmatpush1.msra.mxu0 0.0
  %970 = vmatprep.subr.mxu0 0.0
  %971 = vmatpush1.msra.mxu0 0.0
  %972 = vmatprep.subr.mxu0 0.0
  %973 = vmatpush1.msra.mxu0 0.0
  %974 = vmatprep.subr.mxu0 0.0
  %975 = vmatpush1.msra.mxu0 0.0
  %976 = vmatprep.subr.mxu0 0.0
  %977 = vmatpush1.msra.mxu0 0.0
  %978 = vmatprep.subr.mxu0 0.0
  %979 = vmatpush1.msra.mxu0 0.0
  %980 = vmatprep.subr.mxu0 0.0
  %981 = vmatpush1.msra.mxu0 0.0
  %982 = vmatprep.subr.mxu0 0.0
  %983 = vmatpush1.msra.mxu0 0.0
  %984 = vmatprep.subr.mxu0 0.0
  %985 = vmatpush1.msra.mxu0 0.0
  %986 = vmatprep.subr.mxu0 0.0
  %987 = vmatpush1.msra.mxu0 0.0
  %988 = vmatprep.subr.mxu0 0.0
  %989 = vmatpush1.msra.mxu0 0.0
  %990 = vmatprep.subr.mxu0 0.0
  %991 = vmatpush1.msra.mxu0 0.0
  %992 = vmatprep.subr.mxu0 0.0
  %993 = vmatpush1.msra.mxu0 0.0
  %994 = vmatprep.subr.mxu0 0.0
  %995 = vmatpush1.msra.mxu0 0.0
  %996 = vmatprep.subr.mxu0 0.0
  %997 = vmatpush1.msra.mxu0 0.0
  %998 = vmatprep.subr.mxu0 0.0
  %999 = vmatpush1.msra.mxu0 0.0
  %1000 = vmatprep.subr.mxu0 0.0
  %1001 = vmatpush1.msra.mxu0 0.0
  %1002 = vmatprep.subr.mxu0 0.0
  %1003 = vmatpush1.msra.mxu0 0.0
  %1004 = vmatprep.subr.mxu0 0.0
  %1005 = vmatpush1.msra.mxu0 0.0
  %1006 = vmatprep.mubr.f32.mxu0 0.0
  %1007 = vmatmul.mubr.f32.gmra.mrb[0].mxu0 %v937
  %v1008 = vpop.f32.mrb[0].mxu0
  %v1009 = vadd.f32 0.0, %v1008
  %v1010 = vpop.f32.mrb[0].mxu0
  %1011 = vmatprep.mubr.f32.mxu0 0.0
  %1012 = vmatmul.mubr.f32.gmra.mrb[0].mxu0 %v940
  %v1013 = vpop.f32.mrb[0].mxu0
  %v1014 = vadd.f32 0.0, %v1013
  %v1015 = vpop.f32.mrb[0].mxu0
  %1016 = vdwg.mxu0
  %v1017 = vadd.f32 %v841, %v1009
  %v1018 = vadd.f32 %v846, %v1014
  %v1019 = vmul.f32 %v1017, %v513
  %v1020 = vmul.f32 %v1018, %v514
  %v1021 = vxor.u32 %v1019, 2147483648
  %v1022 = vxor.u32 %v1020, 2147483648
  %v1023 = vmul.f32 %v1021, 1.442695
  %v1024 = vpow.pop %v1023
  %v1025 = vmul.f32 %v1022, 1.442695
  %v1026 = vpow.pop %v1025
  %v1027 = vadd.f32 %v1024, 1.0
  %v1028 = vadd.f32 %v1026, 1.0
  %v1029 = vrcp.pop %v1027
  %v1030 = vmul.f32 1.0, %v1029
  %v1031 = vrcp.pop %v1028
  %v1032 = vmul.f32 1.0, %v1031
  %1033 = vst.msk [vmem:[%s5] sm:$0xff] %vm24, %v1030
  %1034 = vst.msk [vmem:[%s5 + $0x8] sm:$0xff] %vm24, %v1032
  // Predicated region
  $region22: #{tcja_forward.4} parent=0 // pred_check
    _
  $region23: #{tcja_forward.4} parent=0 // pred_check_branch
    %1036 = sbr.rel (0) target = $region25
  $region24: #{tcja_forward.4} parent=0 // pred_region
    _
  $region25: #{tcja_forward.4} parent=0 // pred_fallthru
    _
  // Predicated region
  $region26: #{tcja_forward.4} parent=0 // pred_check
    _
  $region27: #{tcja_forward.4} parent=0 // pred_check_branch
    %1038 = sbr.rel (0) target = $region29
  $region28: #{tcja_forward.4} parent=0 // pred_region
    _
  $region29: #{tcja_forward.4} parent=0 // pred_fallthru
    _

// kernel: tcja_forward.3
$region0: #{tcja_forward.3}
  #allocation0 [shape = 'u32[]', space=smem, size = 0x4, offset = 0x4, fixed_abs, tag = 'smem constant byte address 0x4 - core index']
  #allocation1 [shape = 'u32[144,128]{1,0:T(1,128)}', space=vmem, size = 0x12000, scoped, tag = 'internal scratch']
  %s0 = inlined_call_operand.vmem [shape: f32[16,1024], index: 0, kind: input, shape index: {}]
  %s1 = inlined_call_operand.vmem [shape: bf16[1024,16], index: 1, kind: input, shape index: {}]
  %s2 = inlined_call_operand.vmem [shape: f32[16,16], index: 2, kind: output, shape index: {}]
  %s3 = sld [smem:[#allocation0]]
  $region41: #{tcja_forward.3} parent=0
    _
  %s5 = ssub.s32 1, %s3
  %s6 = scalar_select 0, %s5, %s3
  loop: start=0, step=1, limit=4
  $region2: #{tcja_forward.3} parent=0 // loop_pre_header
    _
  $region3: #{tcja_forward.3} parent=0 // loop_header
    %s8 = sphi 0, %s12
    %p9 = scmp.ge.s32.totalorder %s8, 4
    %s18 = sphi 0, %s20
    %s21 = sphi 0, %s18
    %s22 = sphi 0, %s21
    %s38 = sphi 0, %s22
    %s42 = sphi 0, %s42
    %s44 = sphi 0, %s42
    %s45 = sphi 0, %s44
    %s59 = sphi 0, %s45
    %s65 = sphi 0, %s67
    %s68 = sphi 0, %s65
    %s69 = sphi 0, %s68
    %s85 = sphi 0, %s69
  $region4: #{tcja_forward.3} parent=0 // loop_header_branch
    %11 = sbr.rel (%p9) target = $region8
  $region5: #{tcja_forward.3} parent=0 // loop_body
    %s13 = ssub.s32 %s8, 1
    %s14 = ssub.s32 %s8, 2
    %s15 = sadd.s32 %s8, 1
    %s16 = ssub.s32 %s8, %s15
    %p17 = scmp.eq.s32.totalorder %s16, 0
    %s19 = sadd.s32 %s18, 1
    %s20 = scalar_select %p17, %s18, %s19
    %p23 = pneg %p17
    %p24 = scmp.eq.s32.totalorder %s8, 1
    %p25 = por %p23, %p24
    %p26 = scmp.ne.s32.totalorder %s18, %s21
    %p27 = scmp.eq.s32.totalorder %s8, 0
    %p28 = por %p26, %p27
    %p29 = scmp.ne.s32.totalorder %s18, %s21
    %p30 = scmp.eq.s32.totalorder %s13, 1
    %p31 = por %p29, %p30
    %p32 = scmp.ne.s32.totalorder %s21, %s22
    %p33 = scmp.eq.s32.totalorder %s13, 0
    %p34 = por %p32, %p33
    %p35 = scmp.ne.s32.totalorder %s21, %s22
    %p36 = scmp.eq.s32.totalorder %s14, 1
    %p37 = por %p35, %p36
    %p39 = scmp.ne.s32.totalorder %s22, %s38
    %p40 = scmp.eq.s32.totalorder %s14, 0
    %p41 = por %p39, %p40
    %s43 = sadd.s32 %s42, 1
    %p46 = scmp.eq.s32.totalorder %s8, 1
    %p47 = scmp.ne.s32.totalorder %s42, %s44
    %p48 = scmp.eq.s32.totalorder %s8, 0
    %p49 = por %p47, %p48
    %p50 = scmp.ne.s32.totalorder %s42, %s44
    %p51 = scmp.eq.s32.totalorder %s13, 1
    %p52 = por %p50, %p51
    %p53 = scmp.ne.s32.totalorder %s44, %s45
    %p54 = scmp.eq.s32.totalorder %s13, 0
    %p55 = por %p53, %p54
    %p56 = scmp.ne.s32.totalorder %s44, %s45
    %p57 = scmp.eq.s32.totalorder %s14, 1
    %p58 = por %p56, %p57
    %p60 = scmp.ne.s32.totalorder %s45, %s59
    %p61 = scmp.eq.s32.totalorder %s14, 0
    %p62 = por %p60, %p61
    %s63 = ssub.s32 %s8, %s15
    %p64 = scmp.eq.s32.totalorder %s63, 0
    %s66 = sadd.s32 %s65, 1
    %s67 = scalar_select %p64, %s65, %s66
    %p70 = pneg %p64
    %p71 = scmp.eq.s32.totalorder %s8, 1
    %p72 = por %p70, %p71
    %p73 = scmp.ne.s32.totalorder %s65, %s68
    %p74 = scmp.eq.s32.totalorder %s8, 0
    %p75 = por %p73, %p74
    %p76 = scmp.ne.s32.totalorder %s65, %s68
    %p77 = scmp.eq.s32.totalorder %s13, 1
    %p78 = por %p76, %p77
    %p79 = scmp.ne.s32.totalorder %s68, %s69
    %p80 = scmp.eq.s32.totalorder %s13, 0
    %p81 = por %p79, %p80
    %p82 = scmp.ne.s32.totalorder %s68, %s69
    %p83 = scmp.eq.s32.totalorder %s14, 1
    %p84 = por %p82, %p83
    %p86 = scmp.ne.s32.totalorder %s69, %s85
    %p87 = scmp.eq.s32.totalorder %s14, 0
    %p88 = por %p86, %p87
    %p89 = scmp.le.s32.totalorder 1, %s8
    %p90 = scmp.lt.s32.totalorder %s8, 3
    %p91 = pnand %p89, %p90
    %p92 = pneg %p91
    // Predicated region
    $region9: #{tcja_forward.3} parent=5 // pred_check
      _
    $region10: #{tcja_forward.3} parent=5 // pred_check_branch
      %94 = sbr.rel (%p91) target = $region12
    $region11: #{tcja_forward.3} parent=5 // pred_region
      %s95 = ssub.s32 %s8, 1
      // Predicated region
      $region13: #{tcja_forward.3} parent=11 // pred_check
        %p96 = pneg %p55
      $region14: #{tcja_forward.3} parent=11 // pred_check_branch
        %98 = sbr.rel (%p96) target = $region16
      $region15: #{tcja_forward.3} parent=11 // pred_region
        _
      $region16: #{tcja_forward.3} parent=11 // pred_fallthru
        _
    $region12: #{tcja_forward.3} parent=5 // pred_fallthru
      _
    %p99 = scmp.lt.s32.totalorder %s8, 2
    // Predicated region
    $region17: #{tcja_forward.3} parent=5 // pred_check
      %p100 = pneg %p99
    $region18: #{tcja_forward.3} parent=5 // pred_check_branch
      %102 = sbr.rel (%p100) target = $region20
    $region19: #{tcja_forward.3} parent=5 // pred_region
      // Predicated region
      $region21: #{tcja_forward.3} parent=19 // pred_check
        %p103 = pneg %p28
      $region22: #{tcja_forward.3} parent=19 // pred_check_branch
        %105 = sbr.rel (%p103) target = $region24
      $region23: #{tcja_forward.3} parent=19 // pred_region
        %p106 = scmp.lt.s32.totalorder %s8, 1
        %s107 = scalar_select %p106, %s8, 1
        %s108 = smul.addr %s107, 8
        %s109 = smul.addr %s108, 8
        %s110 = scalar_lea.vmem %s0, %s109
      $region24: #{tcja_forward.3} parent=19 // pred_fallthru
        _
    $region20: #{tcja_forward.3} parent=5 // pred_fallthru
      _
    %p111 = scmp.le.s32.totalorder 1, %s8
    %p112 = scmp.lt.s32.totalorder %s8, 3
    %p113 = pnand %p111, %p112
    %p114 = pneg %p113
    // Predicated region
    $region25: #{tcja_forward.3} parent=5 // pred_check
      _
    $region26: #{tcja_forward.3} parent=5 // pred_check_branch
      %116 = sbr.rel (%p113) target = $region28
    $region27: #{tcja_forward.3} parent=5 // pred_region
      %s117 = ssub.s32 %s8, 1
      %p118 = scmp.lt.s32.totalorder %s13, 1
      %s119 = scalar_select %p118, %s13, 1
      %s120 = smul.addr %s119, 8
      %s121 = smul.addr %s120, 8
      %s122 = scalar_lea.vmem %s0, %s121
      %p123 = pneg %p34
      %p124 = pneg %p31
      %p125 = pneg %p55
      %p126 = pneg %p52
      %p127 = pneg %p81
      %p128 = pneg %p78
      %p129 = scmp.lt.s32.totalorder %s13, 1
      %s130 = scalar_select %p129, %s13, 1
      %s131 = smul.addr %s130, 8
      %s132 = scalar_lea.vmem %s2, %s131
      %p133 = scmp.lt.s32.totalorder %s13, 1
      %s134 = scalar_select %p133, %s13, 1
      %s135 = smul.addr %s134, 8
      %s136 = smul.addr %s135, 8
      %s137 = scalar_lea.vmem %s0, %s136
      %p138 = scmp.lt.s32.totalorder %s13, 1
      %s139 = scalar_select %p138, %s13, 1
      %s140 = smul.addr %s139, 8
      %s141 = scalar_lea.vmem %s2, %s140
      %v143 = vld [vmem:[%s137] sm:$0xff]
      %v144 = vld [vmem:[%s137 + $0x8] sm:$0xff]
      %v145 = vld [vmem:[%s137 + $0x10] sm:$0xff]
      %v146 = vld [vmem:[%s137 + $0x18] sm:$0xff]
      %v147 = vld [vmem:[%s137 + $0x20] sm:$0xff]
      %v148 = vld [vmem:[%s137 + $0x28] sm:$0xff]
      %v149 = vld [vmem:[%s137 + $0x30] sm:$0xff]
      %v150 = vld [vmem:[%s137 + $0x38] sm:$0xff]
      %v151 = vpack.c.bf16 %v143, %v143
      %v152 = vpack.c.bf16 %v144, %v144
      %v153 = vpack.c.bf16 %v145, %v145
      %v154 = vpack.c.bf16 %v146, %v146
      %v155 = vpack.c.bf16 %v147, %v147
      %v156 = vpack.c.bf16 %v148, %v148
      %v157 = vpack.c.bf16 %v149, %v149
      %v158 = vpack.c.bf16 %v150, %v150
      %v159 = vld [vmem:[%s1] sm:$0xf]
      %v160 = vld [vmem:[%s1 + $0x4] sm:$0xf]
      %v161 = vld [vmem:[%s1 + $0x8] sm:$0xf]
      %v162 = vld [vmem:[%s1 + $0xc] sm:$0xf]
      %v163 = vld [vmem:[%s1 + $0x10] sm:$0xf]
      %v164 = vld [vmem:[%s1 + $0x14] sm:$0xf]
      %v165 = vld [vmem:[%s1 + $0x18] sm:$0xf]
      %v166 = vld [vmem:[%s1 + $0x1c] sm:$0xf]
      %v167 = vld [vmem:[%s1 + $0x20] sm:$0xf]
      %v168 = vld [vmem:[%s1 + $0x24] sm:$0xf]
      %v169 = vld [vmem:[%s1 + $0x28] sm:$0xf]
      %v170 = vld [vmem:[%s1 + $0x2c] sm:$0xf]
      %v171 = vld [vmem:[%s1 + $0x30] sm:$0xf]
      %v172 = vld [vmem:[%s1 + $0x34] sm:$0xf]
      %v173 = vld [vmem:[%s1 + $0x38] sm:$0xf]
      %v174 = vld [vmem:[%s1 + $0x3c] sm:$0xf]
      %v175 = vld [vmem:[%s1 + $0x40] sm:$0xf]
      %v176 = vld [vmem:[%s1 + $0x44] sm:$0xf]
      %v177 = vld [vmem:[%s1 + $0x48] sm:$0xf]
      %v178 = vld [vmem:[%s1 + $0x4c] sm:$0xf]
      %v179 = vld [vmem:[%s1 + $0x50] sm:$0xf]
      %v180 = vld [vmem:[%s1 + $0x54] sm:$0xf]
      %v181 = vld [vmem:[%s1 + $0x58] sm:$0xf]
      %v182 = vld [vmem:[%s1 + $0x5c] sm:$0xf]
      %v183 = vld [vmem:[%s1 + $0x60] sm:$0xf]
      %v184 = vld [vmem:[%s1 + $0x64] sm:$0xf]
      %v185 = vld [vmem:[%s1 + $0x68] sm:$0xf]
      %v186 = vld [vmem:[%s1 + $0x6c] sm:$0xf]
      %v187 = vld [vmem:[%s1 + $0x70] sm:$0xf]
      %v188 = vld [vmem:[%s1 + $0x74] sm:$0xf]
      %v189 = vld [vmem:[%s1 + $0x78] sm:$0xf]
      %v190 = vld [vmem:[%s1 + $0x7c] sm:$0xf]
      %v191 = vld [vmem:[%s1 + $0x80] sm:$0xf]
      %v192 = vld [vmem:[%s1 + $0x84] sm:$0xf]
      %v193 = vld [vmem:[%s1 + $0x88] sm:$0xf]
      %v194 = vld [vmem:[%s1 + $0x8c] sm:$0xf]
      %v195 = vld [vmem:[%s1 + $0x90] sm:$0xf]
      %v196 = vld [vmem:[%s1 + $0x94] sm:$0xf]
      %v197 = vld [vmem:[%s1 + $0x98] sm:$0xf]
      %v198 = vld [vmem:[%s1 + $0x9c] sm:$0xf]
      %v199 = vld [vmem:[%s1 + $0xa0] sm:$0xf]
      %v200 = vld [vmem:[%s1 + $0xa4] sm:$0xf]
      %v201 = vld [vmem:[%s1 + $0xa8] sm:$0xf]
      %v202 = vld [vmem:[%s1 + $0xac] sm:$0xf]
      %v203 = vld [vmem:[%s1 + $0xb0] sm:$0xf]
      %v204 = vld [vmem:[%s1 + $0xb4] sm:$0xf]
      %v205 = vld [vmem:[%s1 + $0xb8] sm:$0xf]
      %v206 = vld [vmem:[%s1 + $0xbc] sm:$0xf]
      %v207 = vld [vmem:[%s1 + $0xc0] sm:$0xf]
      %v208 = vld [vmem:[%s1 + $0xc4] sm:$0xf]
      %v209 = vld [vmem:[%s1 + $0xc8] sm:$0xf]
      %v210 = vld [vmem:[%s1 + $0xcc] sm:$0xf]
      %v211 = vld [vmem:[%s1 + $0xd0] sm:$0xf]
      %v212 = vld [vmem:[%s1 + $0xd4] sm:$0xf]
      %v213 = vld [vmem:[%s1 + $0xd8] sm:$0xf]
      %v214 = vld [vmem:[%s1 + $0xdc] sm:$0xf]
      %v215 = vld [vmem:[%s1 + $0xe0] sm:$0xf]
      %v216 = vld [vmem:[%s1 + $0xe4] sm:$0xf]
      %v217 = vld [vmem:[%s1 + $0xe8] sm:$0xf]
      %v218 = vld [vmem:[%s1 + $0xec] sm:$0xf]
      %v219 = vld [vmem:[%s1 + $0xf0] sm:$0xf]
      %v220 = vld [vmem:[%s1 + $0xf4] sm:$0xf]
      %v221 = vld [vmem:[%s1 + $0xf8] sm:$0xf]
      %v222 = vld [vmem:[%s1 + $0xfc] sm:$0xf]
      %v223 = vld [vmem:[%s1 + $0x100] sm:$0xf]
      %v224 = vld [vmem:[%s1 + $0x104] sm:$0xf]
      %v225 = vld [vmem:[%s1 + $0x108] sm:$0xf]
      %v226 = vld [vmem:[%s1 + $0x10c] sm:$0xf]
      %v227 = vld [vmem:[%s1 + $0x110] sm:$0xf]
      %v228 = vld [vmem:[%s1 + $0x114] sm:$0xf]
      %v229 = vld [vmem:[%s1 + $0x118] sm:$0xf]
      %v230 = vld [vmem:[%s1 + $0x11c] sm:$0xf]
      %v231 = vld [vmem:[%s1 + $0x120] sm:$0xf]
      %v232 = vld [vmem:[%s1 + $0x124] sm:$0xf]
      %v233 = vld [vmem:[%s1 + $0x128] sm:$0xf]
      %v234 = vld [vmem:[%s1 + $0x12c] sm:$0xf]
      %v235 = vld [vmem:[%s1 + $0x130] sm:$0xf]
      %v236 = vld [vmem:[%s1 + $0x134] sm:$0xf]
      %v237 = vld [vmem:[%s1 + $0x138] sm:$0xf]
      %v238 = vld [vmem:[%s1 + $0x13c] sm:$0xf]
      %v239 = vld [vmem:[%s1 + $0x140] sm:$0xf]
      %v240 = vld [vmem:[%s1 + $0x144] sm:$0xf]
      %v241 = vld [vmem:[%s1 + $0x148] sm:$0xf]
      %v242 = vld [vmem:[%s1 + $0x14c] sm:$0xf]
      %v243 = vld [vmem:[%s1 + $0x150] sm:$0xf]
      %v244 = vld [vmem:[%s1 + $0x154] sm:$0xf]
      %v245 = vld [vmem:[%s1 + $0x158] sm:$0xf]
      %v246 = vld [vmem:[%s1 + $0x15c] sm:$0xf]
      %v247 = vld [vmem:[%s1 + $0x160] sm:$0xf]
      %v248 = vld [vmem:[%s1 + $0x164] sm:$0xf]
      %v249 = vld [vmem:[%s1 + $0x168] sm:$0xf]
      %v250 = vld [vmem:[%s1 + $0x16c] sm:$0xf]
      %v251 = vld [vmem:[%s1 + $0x170] sm:$0xf]
      %v252 = vld [vmem:[%s1 + $0x174] sm:$0xf]
      %v253 = vld [vmem:[%s1 + $0x178] sm:$0xf]
      %v254 = vld [vmem:[%s1 + $0x17c] sm:$0xf]
      %v255 = vld [vmem:[%s1 + $0x180] sm:$0xf]
      %v256 = vld [vmem:[%s1 + $0x184] sm:$0xf]
      %v257 = vld [vmem:[%s1 + $0x188] sm:$0xf]
      %v258 = vld [vmem:[%s1 + $0x18c] sm:$0xf]
      %v259 = vld [vmem:[%s1 + $0x190] sm:$0xf]
      %v260 = vld [vmem:[%s1 + $0x194] sm:$0xf]
      %v261 = vld [vmem:[%s1 + $0x198] sm:$0xf]
      %v262 = vld [vmem:[%s1 + $0x19c] sm:$0xf]
      %v263 = vld [vmem:[%s1 + $0x1a0] sm:$0xf]
      %v264 = vld [vmem:[%s1 + $0x1a4] sm:$0xf]
      %v265 = vld [vmem:[%s1 + $0x1a8] sm:$0xf]
      %v266 = vld [vmem:[%s1 + $0x1ac] sm:$0xf]
      %v267 = vld [vmem:[%s1 + $0x1b0] sm:$0xf]
      %v268 = vld [vmem:[%s1 + $0x1b4] sm:$0xf]
      %v269 = vld [vmem:[%s1 + $0x1b8] sm:$0xf]
      %v270 = vld [vmem:[%s1 + $0x1bc] sm:$0xf]
      %v271 = vld [vmem:[%s1 + $0x1c0] sm:$0xf]
      %v272 = vld [vmem:[%s1 + $0x1c4] sm:$0xf]
      %v273 = vld [vmem:[%s1 + $0x1c8] sm:$0xf]
      %v274 = vld [vmem:[%s1 + $0x1cc] sm:$0xf]
      %v275 = vld [vmem:[%s1 + $0x1d0] sm:$0xf]
      %v276 = vld [vmem:[%s1 + $0x1d4] sm:$0xf]
      %v277 = vld [vmem:[%s1 + $0x1d8] sm:$0xf]
      %v278 = vld [vmem:[%s1 + $0x1dc] sm:$0xf]
      %v279 = vld [vmem:[%s1 + $0x1e0] sm:$0xf]
      %v280 = vld [vmem:[%s1 + $0x1e4] sm:$0xf]
      %v281 = vld [vmem:[%s1 + $0x1e8] sm:$0xf]
      %v282 = vld [vmem:[%s1 + $0x1ec] sm:$0xf]
      %v283 = vld [vmem:[%s1 + $0x1f0] sm:$0xf]
      %v284 = vld [vmem:[%s1 + $0x1f4] sm:$0xf]
      %v285 = vld [vmem:[%s1 + $0x1f8] sm:$0xf]
      %v286 = vld [vmem:[%s1 + $0x1fc] sm:$0xf]
      %v415 = vunpack.c.l.b16 %v159
      %v416 = vunpack.c.l.b16 %v160
      %v417 = vunpack.c.l.b16 %v161
      %v418 = vunpack.c.l.b16 %v162
      %v419 = vunpack.c.l.b16 %v163
      %v420 = vunpack.c.l.b16 %v164
      %v421 = vunpack.c.l.b16 %v165
      %v422 = vunpack.c.l.b16 %v166
      %v423 = vunpack.c.l.b16 %v167
      %v424 = vunpack.c.l.b16 %v168
      %v425 = vunpack.c.l.b16 %v169
      %v426 = vunpack.c.l.b16 %v170
      %v427 = vunpack.c.l.b16 %v171
      %v428 = vunpack.c.l.b16 %v172
      %v429 = vunpack.c.l.b16 %v173
      %v430 = vunpack.c.l.b16 %v174
      %v431 = vunpack.c.l.b16 %v175
      %v432 = vunpack.c.l.b16 %v176
      %v433 = vunpack.c.l.b16 %v177
      %v434 = vunpack.c.l.b16 %v178
      %v435 = vunpack.c.l.b16 %v179
      %v436 = vunpack.c.l.b16 %v180
      %v437 = vunpack.c.l.b16 %v181
      %v438 = vunpack.c.l.b16 %v182
      %v439 = vunpack.c.l.b16 %v183
      %v440 = vunpack.c.l.b16 %v184
      %v441 = vunpack.c.l.b16 %v185
      %v442 = vunpack.c.l.b16 %v186
      %v443 = vunpack.c.l.b16 %v187
      %v444 = vunpack.c.l.b16 %v188
      %v445 = vunpack.c.l.b16 %v189
      %v446 = vunpack.c.l.b16 %v190
      %v447 = vunpack.c.l.b16 %v191
      %v448 = vunpack.c.l.b16 %v192
      %v449 = vunpack.c.l.b16 %v193
      %v450 = vunpack.c.l.b16 %v194
      %v451 = vunpack.c.l.b16 %v195
      %v452 = vunpack.c.l.b16 %v196
      %v453 = vunpack.c.l.b16 %v197
      %v454 = vunpack.c.l.b16 %v198
      %v455 = vunpack.c.l.b16 %v199
      %v456 = vunpack.c.l.b16 %v200
      %v457 = vunpack.c.l.b16 %v201
      %v458 = vunpack.c.l.b16 %v202
      %v459 = vunpack.c.l.b16 %v203
      %v460 = vunpack.c.l.b16 %v204
      %v461 = vunpack.c.l.b16 %v205
      %v462 = vunpack.c.l.b16 %v206
      %v463 = vunpack.c.l.b16 %v207
      %v464 = vunpack.c.l.b16 %v208
      %v465 = vunpack.c.l.b16 %v209
      %v466 = vunpack.c.l.b16 %v210
      %v467 = vunpack.c.l.b16 %v211
      %v468 = vunpack.c.l.b16 %v212
      %v469 = vunpack.c.l.b16 %v213
      %v470 = vunpack.c.l.b16 %v214
      %v471 = vunpack.c.l.b16 %v215
      %v472 = vunpack.c.l.b16 %v216
      %v473 = vunpack.c.l.b16 %v217
      %v474 = vunpack.c.l.b16 %v218
      %v475 = vunpack.c.l.b16 %v219
      %v476 = vunpack.c.l.b16 %v220
      %v477 = vunpack.c.l.b16 %v221
      %v478 = vunpack.c.l.b16 %v222
      %v479 = vunpack.c.l.b16 %v223
      %v480 = vunpack.c.l.b16 %v224
      %v481 = vunpack.c.l.b16 %v225
      %v482 = vunpack.c.l.b16 %v226
      %v483 = vunpack.c.l.b16 %v227
      %v484 = vunpack.c.l.b16 %v228
      %v485 = vunpack.c.l.b16 %v229
      %v486 = vunpack.c.l.b16 %v230
      %v487 = vunpack.c.l.b16 %v231
      %v488 = vunpack.c.l.b16 %v232
      %v489 = vunpack.c.l.b16 %v233
      %v490 = vunpack.c.l.b16 %v234
      %v491 = vunpack.c.l.b16 %v235
      %v492 = vunpack.c.l.b16 %v236
      %v493 = vunpack.c.l.b16 %v237
      %v494 = vunpack.c.l.b16 %v238
      %v495 = vunpack.c.l.b16 %v239
      %v496 = vunpack.c.l.b16 %v240
      %v497 = vunpack.c.l.b16 %v241
      %v498 = vunpack.c.l.b16 %v242
      %v499 = vunpack.c.l.b16 %v243
      %v500 = vunpack.c.l.b16 %v244
      %v501 = vunpack.c.l.b16 %v245
      %v502 = vunpack.c.l.b16 %v246
      %v503 = vunpack.c.l.b16 %v247
      %v504 = vunpack.c.l.b16 %v248
      %v505 = vunpack.c.l.b16 %v249
      %v506 = vunpack.c.l.b16 %v250
      %v507 = vunpack.c.l.b16 %v251
      %v508 = vunpack.c.l.b16 %v252
      %v509 = vunpack.c.l.b16 %v253
      %v510 = vunpack.c.l.b16 %v254
      %v511 = vunpack.c.l.b16 %v255
      %v512 = vunpack.c.l.b16 %v256
      %v513 = vunpack.c.l.b16 %v257
      %v514 = vunpack.c.l.b16 %v258
      %v515 = vunpack.c.l.b16 %v259
      %v516 = vunpack.c.l.b16 %v260
      %v517 = vunpack.c.l.b16 %v261
      %v518 = vunpack.c.l.b16 %v262
      %v519 = vunpack.c.l.b16 %v263
      %v520 = vunpack.c.l.b16 %v264
      %v521 = vunpack.c.l.b16 %v265
      %v522 = vunpack.c.l.b16 %v266
      %v523 = vunpack.c.l.b16 %v267
      %v524 = vunpack.c.l.b16 %v268
      %v525 = vunpack.c.l.b16 %v269
      %v526 = vunpack.c.l.b16 %v270
      %v527 = vunpack.c.l.b16 %v271
      %v528 = vunpack.c.l.b16 %v272
      %v529 = vunpack.c.l.b16 %v273
      %v530 = vunpack.c.l.b16 %v274
      %v531 = vunpack.c.l.b16 %v275
      %v532 = vunpack.c.l.b16 %v276
      %v533 = vunpack.c.l.b16 %v277
      %v534 = vunpack.c.l.b16 %v278
      %v535 = vunpack.c.l.b16 %v279
      %v536 = vunpack.c.l.b16 %v280
      %v537 = vunpack.c.l.b16 %v281
      %v538 = vunpack.c.l.b16 %v282
      %v539 = vunpack.c.l.b16 %v283
      %v540 = vunpack.c.l.b16 %v284
      %v541 = vunpack.c.l.b16 %v285
      %v542 = vunpack.c.l.b16 %v286
      %v543 = vpack.c.b16 %v416, %v415
      %v544 = vpack.c.b16 %v418, %v417
      %v545 = vpack.c.b16 %v420, %v419
      %v546 = vpack.c.b16 %v422, %v421
      %v547 = vpack.c.b16 %v424, %v423
      %v548 = vpack.c.b16 %v426, %v425
      %v549 = vpack.c.b16 %v428, %v427
      %v550 = vpack.c.b16 %v430, %v429
      %v551 = vpack.c.b16 %v432, %v431
      %v552 = vpack.c.b16 %v434, %v433
      %v553 = vpack.c.b16 %v436, %v435
      %v554 = vpack.c.b16 %v438, %v437
      %v555 = vpack.c.b16 %v440, %v439
      %v556 = vpack.c.b16 %v442, %v441
      %v557 = vpack.c.b16 %v444, %v443
      %v558 = vpack.c.b16 %v446, %v445
      %v559 = vpack.c.b16 %v448, %v447
      %v560 = vpack.c.b16 %v450, %v449
      %v561 = vpack.c.b16 %v452, %v451
      %v562 = vpack.c.b16 %v454, %v453
      %v563 = vpack.c.b16 %v456, %v455
      %v564 = vpack.c.b16 %v458, %v457
      %v565 = vpack.c.b16 %v460, %v459
      %v566 = vpack.c.b16 %v462, %v461
      %v567 = vpack.c.b16 %v464, %v463
      %v568 = vpack.c.b16 %v466, %v465
      %v569 = vpack.c.b16 %v468, %v467
      %v570 = vpack.c.b16 %v470, %v469
      %v571 = vpack.c.b16 %v472, %v471
      %v572 = vpack.c.b16 %v474, %v473
      %v573 = vpack.c.b16 %v476, %v475
      %v574 = vpack.c.b16 %v478, %v477
      %v575 = vpack.c.b16 %v480, %v479
      %v576 = vpack.c.b16 %v482, %v481
      %v577 = vpack.c.b16 %v484, %v483
      %v578 = vpack.c.b16 %v486, %v485
      %v579 = vpack.c.b16 %v488, %v487
      %v580 = vpack.c.b16 %v490, %v489
      %v581 = vpack.c.b16 %v492, %v491
      %v582 = vpack.c.b16 %v494, %v493
      %v583 = vpack.c.b16 %v496, %v495
      %v584 = vpack.c.b16 %v498, %v497
      %v585 = vpack.c.b16 %v500, %v499
      %v586 = vpack.c.b16 %v502, %v501
      %v587 = vpack.c.b16 %v504, %v503
      %v588 = vpack.c.b16 %v506, %v505
      %v589 = vpack.c.b16 %v508, %v507
      %v590 = vpack.c.b16 %v510, %v509
      %v591 = vpack.c.b16 %v512, %v511
      %v592 = vpack.c.b16 %v514, %v513
      %v593 = vpack.c.b16 %v516, %v515
      %v594 = vpack.c.b16 %v518, %v517
      %v595 = vpack.c.b16 %v520, %v519
      %v596 = vpack.c.b16 %v522, %v521
      %v597 = vpack.c.b16 %v524, %v523
      %v598 = vpack.c.b16 %v526, %v525
      %v599 = vpack.c.b16 %v528, %v527
      %v600 = vpack.c.b16 %v530, %v529
      %v601 = vpack.c.b16 %v532, %v531
      %v602 = vpack.c.b16 %v534, %v533
      %v603 = vpack.c.b16 %v536, %v535
      %v604 = vpack.c.b16 %v538, %v537
      %v605 = vpack.c.b16 %v540, %v539
      %v606 = vpack.c.b16 %v542, %v541
      %671 = vmatprep.subr.bf16.mxu0 0
      %672 = vmatpush1.bf16.msra.mxu0 %v543
      %673 = vmatprep.subr.bf16.mxu0 0
      %674 = vmatpush1.bf16.msra.mxu0 %v544
      %675 = vmatprep.subr.bf16.mxu0 0
      %676 = vmatpush1.bf16.msra.mxu0 %v545
      %677 = vmatprep.subr.bf16.mxu0 0
      %678 = vmatpush1.bf16.msra.mxu0 %v546
      %679 = vmatprep.subr.bf16.mxu0 0
      %680 = vmatpush1.bf16.msra.mxu0 %v547
      %681 = vmatprep.subr.bf16.mxu0 0
      %682 = vmatpush1.bf16.msra.mxu0 %v548
      %683 = vmatprep.subr.bf16.mxu0 0
      %684 = vmatpush1.bf16.msra.mxu0 %v549
      %685 = vmatprep.subr.bf16.mxu0 0
      %686 = vmatpush1.bf16.msra.mxu0 %v550
      %687 = vmatprep.subr.bf16.mxu0 0
      %688 = vmatpush1.bf16.msra.mxu0 %v551
      %689 = vmatprep.subr.bf16.mxu0 0
      %690 = vmatpush1.bf16.msra.mxu0 %v552
      %691 = vmatprep.subr.bf16.mxu0 0
      %692 = vmatpush1.bf16.msra.mxu0 %v553
      %693 = vmatprep.subr.bf16.mxu0 0
      %694 = vmatpush1.bf16.msra.mxu0 %v554
      %695 = vmatprep.subr.bf16.mxu0 0
      %696 = vmatpush1.bf16.msra.mxu0 %v555
      %697 = vmatprep.subr.bf16.mxu0 0
      %698 = vmatpush1.bf16.msra.mxu0 %v556
      %699 = vmatprep.subr.bf16.mxu0 0
      %700 = vmatpush1.bf16.msra.mxu0 %v557
      %701 = vmatprep.subr.bf16.mxu0 0
      %702 = vmatpush1.bf16.msra.mxu0 %v558
      %703 = vmatprep.mubr.bf16.mxu0 %v152
      %704 = vmatmul.mubr.bf16.gmra.mrb[0].mxu0 %v151
      %v705 = vpop.f32.mrb[0].mxu0
      %v706 = vadd.f32 0.0, %v705
      %v707 = vpop.f32.mrb[0].mxu0
      %v708 = vpop.f32.mrb[0].mxu0
      %v709 = vpop.f32.mrb[0].mxu0
      %710 = vdwg.mxu0
      %711 = vmatprep.subr.bf16.mxu0 0
      %712 = vmatpush1.bf16.msra.mxu0 %v559
      %713 = vmatprep.subr.bf16.mxu0 0
      %714 = vmatpush1.bf16.msra.mxu0 %v560
      %715 = vmatprep.subr.bf16.mxu0 0
      %716 = vmatpush1.bf16.msra.mxu0 %v561
      %717 = vmatprep.subr.bf16.mxu0 0
      %718 = vmatpush1.bf16.msra.mxu0 %v562
      %719 = vmatprep.subr.bf16.mxu0 0
      %720 = vmatpush1.bf16.msra.mxu0 %v563
      %721 = vmatprep.subr.bf16.mxu0 0
      %722 = vmatpush1.bf16.msra.mxu0 %v564
      %723 = vmatprep.subr.bf16.mxu0 0
      %724 = vmatpush1.bf16.msra.mxu0 %v565
      %725 = vmatprep.subr.bf16.mxu0 0
      %726 = vmatpush1.bf16.msra.mxu0 %v566
      %727 = vmatprep.subr.bf16.mxu0 0
      %728 = vmatpush1.bf16.msra.mxu0 %v567
      %729 = vmatprep.subr.bf16.mxu0 0
      %730 = vmatpush1.bf16.msra.mxu0 %v568
      %731 = vmatprep.subr.bf16.mxu0 0
      %732 = vmatpush1.bf16.msra.mxu0 %v569
      %733 = vmatprep.subr.bf16.mxu0 0
      %734 = vmatpush1.bf16.msra.mxu0 %v570
      %735 = vmatprep.subr.bf16.mxu0 0
      %736 = vmatpush1.bf16.msra.mxu0 %v571
      %737 = vmatprep.subr.bf16.mxu0 0
      %738 = vmatpush1.bf16.msra.mxu0 %v572
      %739 = vmatprep.subr.bf16.mxu0 0
      %740 = vmatpush1.bf16.msra.mxu0 %v573
      %741 = vmatprep.subr.bf16.mxu0 0
      %742 = vmatpush1.bf16.msra.mxu0 %v574
      %743 = vmatprep.mubr.bf16.mxu0 %v154
      %744 = vmatmul.mubr.bf16.gmra.mrb[0].mxu0 %v153
      %v745 = vpop.f32.mrb[0].mxu0
      %v746 = vadd.f32 %v706, %v745
      %v747 = vpop.f32.mrb[0].mxu0
      %v748 = vpop.f32.mrb[0].mxu0
      %v749 = vpop.f32.mrb[0].mxu0
      %750 = vdwg.mxu0
      %751 = vmatprep.subr.bf16.mxu0 0
      %752 = vmatpush1.bf16.msra.mxu0 %v575
      %753 = vmatprep.subr.bf16.mxu0 0
      %754 = vmatpush1.bf16.msra.mxu0 %v576
      %755 = vmatprep.subr.bf16.mxu0 0
      %756 = vmatpush1.bf16.msra.mxu0 %v577
      %757 = vmatprep.subr.bf16.mxu0 0
      %758 = vmatpush1.bf16.msra.mxu0 %v578
      %759 = vmatprep.subr.bf16.mxu0 0
      %760 = vmatpush1.bf16.msra.mxu0 %v579
      %761 = vmatprep.subr.bf16.mxu0 0
      %762 = vmatpush1.bf16.msra.mxu0 %v580
      %763 = vmatprep.subr.bf16.mxu0 0
      %764 = vmatpush1.bf16.msra.mxu0 %v581
      %765 = vmatprep.subr.bf16.mxu0 0
      %766 = vmatpush1.bf16.msra.mxu0 %v582
      %767 = vmatprep.subr.bf16.mxu0 0
      %768 = vmatpush1.bf16.msra.mxu0 %v583
      %769 = vmatprep.subr.bf16.mxu0 0
      %770 = vmatpush1.bf16.msra.mxu0 %v584
      %771 = vmatprep.subr.bf16.mxu0 0
      %772 = vmatpush1.bf16.msra.mxu0 %v585
      %773 = vmatprep.subr.bf16.mxu0 0
      %774 = vmatpush1.bf16.msra.mxu0 %v586
      %775 = vmatprep.subr.bf16.mxu0 0
      %776 = vmatpush1.bf16.msra.mxu0 %v587
      %777 = vmatprep.subr.bf16.mxu0 0
      %778 = vmatpush1.bf16.msra.mxu0 %v588
      %779 = vmatprep.subr.bf16.mxu0 0
      %780 = vmatpush1.bf16.msra.mxu0 %v589
      %781 = vmatprep.subr.bf16.mxu0 0
      %782 = vmatpush1.bf16.msra.mxu0 %v590
      %783 = vmatprep.mubr.bf16.mxu0 %v156
      %784 = vmatmul.mubr.bf16.gmra.mrb[0].mxu0 %v155
      %v785 = vpop.f32.mrb[0].mxu0
      %v786 = vadd.f32 %v746, %v785
      %v787 = vpop.f32.mrb[0].mxu0
      %v788 = vpop.f32.mrb[0].mxu0
      %v789 = vpop.f32.mrb[0].mxu0
      %790 = vdwg.mxu0
      %791 = vmatprep.subr.bf16.mxu0 0
      %792 = vmatpush1.bf16.msra.mxu0 %v591
      %793 = vmatprep.subr.bf16.mxu0 0
      %794 = vmatpush1.bf16.msra.mxu0 %v592
      %795 = vmatprep.subr.bf16.mxu0 0
      %796 = vmatpush1.bf16.msra.mxu0 %v593
      %797 = vmatprep.subr.bf16.mxu0 0
      %798 = vmatpush1.bf16.msra.mxu0 %v594
      %799 = vmatprep.subr.bf16.mxu0 0
      %800 = vmatpush1.bf16.msra.mxu0 %v595
      %801 = vmatprep.subr.bf16.mxu0 0
      %802 = vmatpush1.bf16.msra.mxu0 %v596
      %803 = vmatprep.subr.bf16.mxu0 0
      %804 = vmatpush1.bf16.msra.mxu0 %v597
      %805 = vmatprep.subr.bf16.mxu0 0
      %806 = vmatpush1.bf16.msra.mxu0 %v598
      %807 = vmatprep.subr.bf16.mxu0 0
      %808 = vmatpush1.bf16.msra.mxu0 %v599
      %809 = vmatprep.subr.bf16.mxu0 0
      %810 = vmatpush1.bf16.msra.mxu0 %v600
      %811 = vmatprep.subr.bf16.mxu0 0
      %812 = vmatpush1.bf16.msra.mxu0 %v601
      %813 = vmatprep.subr.bf16.mxu0 0
      %814 = vmatpush1.bf16.msra.mxu0 %v602
      %815 = vmatprep.subr.bf16.mxu0 0
      %816 = vmatpush1.bf16.msra.mxu0 %v603
      %817 = vmatprep.subr.bf16.mxu0 0
      %818 = vmatpush1.bf16.msra.mxu0 %v604
      %819 = vmatprep.subr.bf16.mxu0 0
      %820 = vmatpush1.bf16.msra.mxu0 %v605
      %821 = vmatprep.subr.bf16.mxu0 0
      %822 = vmatpush1.bf16.msra.mxu0 %v606
      %823 = vmatprep.mubr.bf16.mxu0 %v158
      %824 = vmatmul.mubr.bf16.gmra.mrb[0].mxu0 %v157
      %v825 = vpop.f32.mrb[0].mxu0
      %v826 = vadd.f32 %v786, %v825
      %v827 = vpop.f32.mrb[0].mxu0
      %v828 = vpop.f32.mrb[0].mxu0
      %v829 = vpop.f32.mrb[0].mxu0
      %830 = vdwg.mxu0
      %v831 = vmul.f32 %v826, 0.015625
      %vm832 = vcmask 130048
      %833 = vst.msk [vmem:[%s141] sm:$0xff] %vm832, %v831
      %p834 = scmp.lt.s32.totalorder %s13, 1
      %s835 = scalar_select %p834, %s13, 1
      %s836 = smul.addr %s835, 8
      %s837 = scalar_lea.vmem %s2, %s836
      // Predicated region
      $region29: #{tcja_forward.3} parent=27 // pred_check
        %p838 = pneg %p78
      $region30: #{tcja_forward.3} parent=27 // pred_check_branch
        %840 = sbr.rel (%p838) target = $region32
      $region31: #{tcja_forward.3} parent=27 // pred_region
        _
      $region32: #{tcja_forward.3} parent=27 // pred_fallthru
        _
    $region28: #{tcja_forward.3} parent=5 // pred_fallthru
      _
    %p841 = scmp.le.s32.totalorder 2, %s8
    // Predicated region
    $region33: #{tcja_forward.3} parent=5 // pred_check
      %p842 = pneg %p841
    $region34: #{tcja_forward.3} parent=5 // pred_check_branch
      %844 = sbr.rel (%p842) target = $region36
    $region35: #{tcja_forward.3} parent=5 // pred_region
      %s845 = ssub.s32 %s8, 2
      // Predicated region
      $region37: #{tcja_forward.3} parent=35 // pred_check
        %p846 = pneg %p84
      $region38: #{tcja_forward.3} parent=35 // pred_check_branch
        %848 = sbr.rel (%p846) target = $region40
      $region39: #{tcja_forward.3} parent=35 // pred_region
        %p849 = scmp.lt.s32.totalorder %s14, 1
        %s850 = scalar_select %p849, %s14, 1
        %s851 = smul.addr %s850, 8
        %s852 = scalar_lea.vmem %s2, %s851
      $region40: #{tcja_forward.3} parent=35 // pred_fallthru
        _
    $region36: #{tcja_forward.3} parent=5 // pred_fallthru
      _
  $region6: #{tcja_forward.3} parent=0 // loop_footer
    %s12 = sadd.s32 1, %s8
  $region7: #{tcja_forward.3} parent=0 // loop_footer_branch
    %7 = sbr.rel target = $region3
  $region8: #{tcja_forward.3} parent=0 // loop_exit
    _

</llo_original>
